<compile_context>
chip_gen: v6e
topology: v6e:2x2x1
jax: 0.10.0
libtpu: 0.0.40
codegen_flags: <defaults>
</compile_context>

<pallas_src>
import functools

import jax
import jax.numpy as jnp
from jax import lax
from jax.experimental import pallas as pl
from jax.experimental.pallas import tpu as pltpu

NUM_ATT = 35      # nn.Conv2d(2048, 35, 1x1) is hard-coded to 35 outputs in the module
ATT_PAD = 128     # lane-dense padded classifier width (unmasked vst), sliced to 35 later
TM_MAX = 16       # feature rows per grid step; f32 block ~6.4 MiB, fits all generations
LAYER_CFG = [(64, 3, 1), (128, 4, 2), (256, 6, 2), (512, 3, 2)]  # last_conv_stride=2


# ----------------------------------------------------------------------------
# Plain-JAX glue: ResNet-50 backbone in NHWC (deterministic synthetic weights)
# ----------------------------------------------------------------------------
def conv2d(x, w, stride=1, padding=0):
    return lax.conv_general_dilated(
        x, w,
        window_strides=(stride, stride),
        padding=[(padding, padding), (padding, padding)],
        dimension_numbers=("NHWC", "HWIO", "NHWC"))


def batchnorm_eval(x, eps=1e-5):
    # Synthetic eval-mode BN: gamma=1, beta=0, running_mean=0, running_var=1.
    return x * (1.0 / jnp.sqrt(1.0 + eps))


def relu(x):
    return jnp.maximum(x, 0.0)


def maxpool_3x3_s2_p1(x):
    return lax.reduce_window(
        x, -jnp.inf, lax.max,
        window_dimensions=(1, 3, 3, 1),
        window_strides=(1, 2, 2, 1),
        padding=((0, 0), (1, 1), (1, 1), (0, 0)))


def _kaiming(key, shape):
    # shape is HWIO: fan_in = KH * KW * Cin
    fan_in = shape[0] * shape[1] * shape[2]
    std = (2.0 / fan_in) ** 0.5
    return std * jax.random.normal(key, shape, dtype=jnp.float32)


def make_params(key):
    kidx = [0]

    def nk():
        kidx[0] += 1
        return jax.random.fold_in(key, kidx[0])

    params = {"conv1": _kaiming(nk(), (7, 7, 3, 64)), "layers": []}
    inplanes = 64
    for planes, n_blocks, stride in LAYER_CFG:
        blocks = []
        for b in range(n_blocks):
            s = stride if b == 0 else 1
            blk = {
                "conv1": _kaiming(nk(), (1, 1, inplanes, planes)),
                "conv2": _kaiming(nk(), (3, 3, planes, planes)),
                "conv3": _kaiming(nk(), (1, 1, planes, planes * 4)),
            }
            if s != 1 or inplanes != planes * 4:
                blk["down"] = _kaiming(nk(), (1, 1, inplanes, planes * 4))
            blocks.append(blk)
            inplanes = planes * 4
        params["layers"].append(blocks)

    # DeepMAR classifier: init.normal_(weight, std=0.001); init.constant_(bias, 0)
    cls_w = 0.001 * jax.random.normal(nk(), (NUM_ATT, 2048, 1, 1), dtype=jnp.float32)
    cls_b = jnp.zeros((NUM_ATT,), dtype=jnp.float32)

    # One-time head-parameter prep (hoisted out of the per-forward path):
    # (35,2048,1,1) -> (2048,35) -> zero-pad lanes to 128 so the kernel's matmul
    # output / store is lane-dense and unmasked.
    params["cls_w_mat"] = jnp.pad(cls_w.reshape(NUM_ATT, 2048).T,
                                  ((0, 0), (0, ATT_PAD - NUM_ATT)))       # (2048, 128)
    params["cls_b_mat"] = jnp.pad(cls_b.reshape(1, NUM_ATT),
                                  ((0, 0), (0, ATT_PAD - NUM_ATT)))       # (1, 128)
    return params


def bottleneck(x, blk, stride):
    out = relu(batchnorm_eval(conv2d(x, blk["conv1"])))
    out = relu(batchnorm_eval(conv2d(out, blk["conv2"], stride=stride, padding=1)))
    out = batchnorm_eval(conv2d(out, blk["conv3"]))
    if "down" in blk:
        identity = batchnorm_eval(conv2d(x, blk["down"], stride=stride))
    else:
        identity = x
    return relu(out + identity)


def resnet50_features(params, x_nhwc):
    x = relu(batchnorm_eval(conv2d(x_nhwc, params["conv1"], stride=2, padding=3)))
    x = maxpool_3x3_s2_p1(x)
    for (planes, n_blocks, stride), blocks in zip(LAYER_CFG, params["layers"]):
        for b, blk in enumerate(blocks):
            x = bottleneck(x, blk, stride if b == 0 else 1)
    return x  # (N, 7, 7, 2048) for 224x224 input


# ----------------------------------------------------------------------------
# Pallas kernel: fused avg_pool2d(7,7) + dropout(eval) + 1x1 conv + flatten
# ----------------------------------------------------------------------------
def _deepmar_head_kernel(f_ref, w_ref, b_ref, o_ref, *, inv_hw):
    # f_ref: (TM, 7, 7, C) f32 raw backbone features streamed straight from HBM
    # w_ref: (C, ATT_PAD) f32 resident classifier weight; b_ref: (1, ATT_PAD) f32 bias
    # o_ref: (TM, ATT_PAD) f32 logits (lane padding sliced off outside the kernel)
    h = f_ref.shape[1]
    # Global average pool: statically-unrolled per-row sublane reductions keep the
    # live f32 intermediate to one (TM, 7, C) slab per step (VPU has plenty of slack;
    # the kernel is DMA-bound).
    acc = jnp.sum(f_ref[:, 0], axis=1)                    # (TM, C)
    for k in range(1, h):
        acc = acc + jnp.sum(f_ref[:, k], axis=1)
    pooled = acc * inv_hw                                 # == F.avg_pool2d(x, (7,7))
    # TODO(synk): F.dropout(p=0.5) is identity in eval mode; training-mode dropout
    # (pltpu.prng_* + mask/scale) is not implemented here.
    logits = jnp.dot(pooled, w_ref[...], preferred_element_type=jnp.float32)  # MXU
    o_ref[...] = logits + b_ref[...]


def deepmar_head(feats_nhwc, w_mat, b_mat):
    n, h, w, c = feats_nhwc.shape
    hw = h * w                         # 49; avg_pool2d((7,7)) on a 7x7 map == global mean
    # TM rows per grid step: full batch when small (no padding, block == full dim),
    # otherwise 16 (8-aligned output blocks; ragged last block handled by Pallas and
    # its masked/garbage rows never reach the returned logits).
    tm = n if n <= TM_MAX else TM_MAX
    grid = (pl.cdiv(n, tm),)

    flops = 2 * n * c * ATT_PAD + n * hw * c
    bytes_accessed = (n * hw * c * 4          # f32 feature stream
                      + c * ATT_PAD * 4       # resident weight
                      + ATT_PAD * 4           # bias
                      + n * ATT_PAD * 4)      # logits out

    out = pl.pallas_call(
        functools.partial(_deepmar_head_kernel, inv_hw=1.0 / hw),
        out_shape=jax.ShapeDtypeStruct((n, ATT_PAD), jnp.float32),
        grid=grid,
        in_specs=[
            # Raw f32 NHWC features: (7, 2048) trailing dims equal the full array dims,
            # so the (8,128) rule is satisfied without any pre-kernel pad/reshape copy.
            pl.BlockSpec((tm, h, w, c), lambda i: (i, 0, 0, 0)),
            pl.BlockSpec((c, ATT_PAD), lambda i: (0, 0)),      # weight resident
            pl.BlockSpec((1, ATT_PAD), lambda i: (0, 0)),      # bias resident
        ],
        out_specs=pl.BlockSpec((tm, ATT_PAD), lambda i: (i, 0)),
        compiler_params=pltpu.CompilerParams(
            dimension_semantics=("parallel",),
            vmem_limit_bytes=32 * 1024 * 1024),   # keeps double-buffering alive on v5e/v6e/v7x
        cost_estimate=pl.CostEstimate(flops=flops, transcendentals=0,
                                      bytes_accessed=bytes_accessed),
    )(feats_nhwc, w_mat, b_mat)

    return out[:, :NUM_ATT]  # x.view(x.size(0), -1) -> (N, 35)


@jax.jit
def deepmar_forward(params, x_nchw):
    x = jnp.transpose(x_nchw, (0, 2, 3, 1))       # external NCHW interface -> NHWC backbone
    feats = resnet50_features(params, x)          # self.base(x): (N, 7, 7, 2048) channels-last
    return deepmar_head(feats, params["cls_w_mat"], params["cls_b_mat"])  # (N, 35)


if __name__ == "__main__":
    key = jax.random.PRNGKey(0)
    params = make_params(jax.random.fold_in(key, 1))
    # NCHW images (PyTorch interface); 224x224 -> 7x7 backbone features, batch = 2.
    x = jax.random.normal(jax.random.fold_in(key, 2), (2, 3, 224, 224),
                          dtype=jnp.float32)
    out = deepmar_forward(params, x)
    out = jax.block_until_ready(out)
    assert out.shape == (2, NUM_ATT) and out.dtype == jnp.float32
    print("KERNEL_OK")
</pallas_src>

<mosaic_0001>
module attributes {stable_mosaic.version = 11 : i64} {
  func.func @_deepmar_head_kernel(%arg0: i32, %arg1: memref<2x7x7x2048xf32, #tpu.memory_space<vmem>>, %arg2: memref<2048x128xf32, #tpu.memory_space<vmem>>, %arg3: memref<1x128xf32, #tpu.memory_space<vmem>>, %arg4: memref<2x128xf32, #tpu.memory_space<vmem>>) attributes {dimension_semantics = [#tpu.dimension_semantics<parallel>], iteration_bounds = array<i64: 1>, scalar_prefetch = 0 : i64, scratch_operands = 0 : i64, tpu.core_type = #tpu.core_type<tc>, window_params = [{transform_indices = @transform_0, window_bounds = array<i64: 2, 7, 7, 2048>}, {pipeline_mode = #tpu.pipeline_mode<synchronous>, transform_indices = @transform_1, window_bounds = array<i64: 2048, 128>}, {pipeline_mode = #tpu.pipeline_mode<synchronous>, transform_indices = @transform_2, window_bounds = array<i64: 1, 128>}, {transform_indices = @transform_3, window_bounds = array<i64: 2, 128>}]} {
    %c0 = arith.constant 0 : index
    %c0_0 = arith.constant 0 : index
    %c0_1 = arith.constant 0 : index
    %c0_2 = arith.constant 0 : index
    %0 = vector.load %arg1[%c0, %c0_0, %c0_1, %c0_2] : memref<2x7x7x2048xf32, #tpu.memory_space<vmem>>, vector<2x1x7x2048xf32>
    %1 = vector.shape_cast %0 : vector<2x1x7x2048xf32> to vector<2x7x2048xf32>
    %cst = arith.constant dense<0.000000e+00> : vector<2x2048xf32>
    %2 = vector.multi_reduction <add>, %1, %cst [1] : vector<2x7x2048xf32> to vector<2x2048xf32>
    %c0_3 = arith.constant 0 : index
    %c1 = arith.constant 1 : index
    %c0_4 = arith.constant 0 : index
    %c0_5 = arith.constant 0 : index
    %3 = vector.load %arg1[%c0_3, %c1, %c0_4, %c0_5] : memref<2x7x7x2048xf32, #tpu.memory_space<vmem>>, vector<2x1x7x2048xf32>
    %4 = vector.shape_cast %3 : vector<2x1x7x2048xf32> to vector<2x7x2048xf32>
    %cst_6 = arith.constant dense<0.000000e+00> : vector<2x2048xf32>
    %5 = vector.multi_reduction <add>, %4, %cst_6 [1] : vector<2x7x2048xf32> to vector<2x2048xf32>
    %6 = arith.addf %2, %5 : vector<2x2048xf32>
    %c0_7 = arith.constant 0 : index
    %c2 = arith.constant 2 : index
    %c0_8 = arith.constant 0 : index
    %c0_9 = arith.constant 0 : index
    %7 = vector.load %arg1[%c0_7, %c2, %c0_8, %c0_9] : memref<2x7x7x2048xf32, #tpu.memory_space<vmem>>, vector<2x1x7x2048xf32>
    %8 = vector.shape_cast %7 : vector<2x1x7x2048xf32> to vector<2x7x2048xf32>
    %cst_10 = arith.constant dense<0.000000e+00> : vector<2x2048xf32>
    %9 = vector.multi_reduction <add>, %8, %cst_10 [1] : vector<2x7x2048xf32> to vector<2x2048xf32>
    %10 = arith.addf %6, %9 : vector<2x2048xf32>
    %c0_11 = arith.constant 0 : index
    %c3 = arith.constant 3 : index
    %c0_12 = arith.constant 0 : index
    %c0_13 = arith.constant 0 : index
    %11 = vector.load %arg1[%c0_11, %c3, %c0_12, %c0_13] : memref<2x7x7x2048xf32, #tpu.memory_space<vmem>>, vector<2x1x7x2048xf32>
    %12 = vector.shape_cast %11 : vector<2x1x7x2048xf32> to vector<2x7x2048xf32>
    %cst_14 = arith.constant dense<0.000000e+00> : vector<2x2048xf32>
    %13 = vector.multi_reduction <add>, %12, %cst_14 [1] : vector<2x7x2048xf32> to vector<2x2048xf32>
    %14 = arith.addf %10, %13 : vector<2x2048xf32>
    %c0_15 = arith.constant 0 : index
    %c4 = arith.constant 4 : index
    %c0_16 = arith.constant 0 : index
    %c0_17 = arith.constant 0 : index
    %15 = vector.load %arg1[%c0_15, %c4, %c0_16, %c0_17] : memref<2x7x7x2048xf32, #tpu.memory_space<vmem>>, vector<2x1x7x2048xf32>
    %16 = vector.shape_cast %15 : vector<2x1x7x2048xf32> to vector<2x7x2048xf32>
    %cst_18 = arith.constant dense<0.000000e+00> : vector<2x2048xf32>
    %17 = vector.multi_reduction <add>, %16, %cst_18 [1] : vector<2x7x2048xf32> to vector<2x2048xf32>
    %18 = arith.addf %14, %17 : vector<2x2048xf32>
    %c0_19 = arith.constant 0 : index
    %c5 = arith.constant 5 : index
    %c0_20 = arith.constant 0 : index
    %c0_21 = arith.constant 0 : index
    %19 = vector.load %arg1[%c0_19, %c5, %c0_20, %c0_21] : memref<2x7x7x2048xf32, #tpu.memory_space<vmem>>, vector<2x1x7x2048xf32>
    %20 = vector.shape_cast %19 : vector<2x1x7x2048xf32> to vector<2x7x2048xf32>
    %cst_22 = arith.constant dense<0.000000e+00> : vector<2x2048xf32>
    %21 = vector.multi_reduction <add>, %20, %cst_22 [1] : vector<2x7x2048xf32> to vector<2x2048xf32>
    %22 = arith.addf %18, %21 : vector<2x2048xf32>
    %c0_23 = arith.constant 0 : index
    %c6 = arith.constant 6 : index
    %c0_24 = arith.constant 0 : index
    %c0_25 = arith.constant 0 : index
    %23 = vector.load %arg1[%c0_23, %c6, %c0_24, %c0_25] : memref<2x7x7x2048xf32, #tpu.memory_space<vmem>>, vector<2x1x7x2048xf32>
    %24 = vector.shape_cast %23 : vector<2x1x7x2048xf32> to vector<2x7x2048xf32>
    %cst_26 = arith.constant dense<0.000000e+00> : vector<2x2048xf32>
    %25 = vector.multi_reduction <add>, %24, %cst_26 [1] : vector<2x7x2048xf32> to vector<2x2048xf32>
    %26 = arith.addf %22, %25 : vector<2x2048xf32>
    %cst_27 = arith.constant 0.0204081628 : f32
    %27 = vector.broadcast %cst_27 : f32 to vector<2x2048xf32>
    %28 = arith.mulf %26, %27 : vector<2x2048xf32>
    %c0_28 = arith.constant 0 : index
    %c0_29 = arith.constant 0 : index
    %29 = vector.load %arg2[%c0_28, %c0_29] : memref<2048x128xf32, #tpu.memory_space<vmem>>, vector<2048x128xf32>
    %cst_30 = arith.constant dense<0.000000e+00> : vector<2x128xf32>
    %30 = tpu.matmul %28, %29, %cst_30 {dimension_numbers = #tpu.dot_dimension_numbers<[1], [0], [0], [1], [0, 0, 1, 1], [], []>} : vector<2x2048xf32>, vector<2048x128xf32>, vector<2x128xf32> -> vector<2x128xf32>
    %c0_31 = arith.constant 0 : index
    %c0_32 = arith.constant 0 : index
    %31 = vector.load %arg3[%c0_31, %c0_32] : memref<1x128xf32, #tpu.memory_space<vmem>>, vector<1x128xf32>
    %32 = vector.broadcast %31 : vector<1x128xf32> to vector<2x128xf32>
    %33 = arith.addf %30, %32 : vector<2x128xf32>
    %c0_33 = arith.constant 0 : index
    %c0_34 = arith.constant 0 : index
    %34 = vector.load %arg4[%c0_33, %c0_34] : memref<2x128xf32, #tpu.memory_space<vmem>>, vector<2x128xf32>
    tpu.vector_store %arg4[%c0_33, %c0_34], %33 {strides = array<i32>} : memref<2x128xf32, #tpu.memory_space<vmem>>, vector<2x128xf32>,
    return
  }
  func.func @transform_0(%arg0: i32) -> (i32, i32, i32, i32) {
    %c0_i32 = arith.constant 0 : i32
    %c0_i32_0 = arith.constant 0 : i32
    %c0_i32_1 = arith.constant 0 : i32
    %c0_i32_2 = arith.constant 0 : i32
    return %arg0, %c0_i32, %c0_i32_0, %c0_i32_1 : i32, i32, i32, i32
  }
  func.func @transform_1(%arg0: i32) -> (i32, i32) {
    %c0_i32 = arith.constant 0 : i32
    %c0_i32_0 = arith.constant 0 : i32
    %c0_i32_1 = arith.constant 0 : i32
    return %c0_i32, %c0_i32_0 : i32, i32
  }
  func.func @transform_2(%arg0: i32) -> (i32, i32) {
    %c0_i32 = arith.constant 0 : i32
    %c0_i32_0 = arith.constant 0 : i32
    %c0_i32_1 = arith.constant 0 : i32
    return %c0_i32, %c0_i32_0 : i32, i32
  }
  func.func @transform_3(%arg0: i32) -> (i32, i32) {
    %c0_i32 = arith.constant 0 : i32
    %c0_i32_0 = arith.constant 0 : i32
    return %arg0, %c0_i32 : i32, i32
  }
}

</mosaic_0001>

<llo_original>
// kernel: deepmar_forward.1
$region0: #{deepmar_forward.1}
  #allocation0 [shape = 'u32[]', space=smem, size = 0x4, offset = 0x4, fixed_abs, tag = 'smem constant byte address 0x4 - core index']
  #allocation1 [shape = 'u32[144,128]{1,0:T(1,128)}', space=vmem, size = 0x12000, scoped, tag = 'internal scratch']
  %s0 = inlined_call_operand.vmem [shape: f32[2,7,7,2048], index: 0, kind: input, shape index: {}]
  %s1 = inlined_call_operand.vmem [shape: f32[2048,128], index: 1, kind: input, shape index: {}]
  %s2 = inlined_call_operand.vmem [shape: f32[1,128], index: 2, kind: input, shape index: {}]
  %s3 = inlined_call_operand.hbm [shape: f32[2,128], index: 3, kind: output, shape index: {}]
  %s4 = sld [smem:[#allocation0]]
  $region22: #{deepmar_forward.1} parent=0
    _
  %s6 = ssub.s32 1, %s4
  %s7 = scalar_select 0, %s6, %s4
  $region1: #{deepmar_forward.1} parent=0
    #allocation2 [shape = 'u8[1024]{0}', space=vmem, size = 0x400, scoped, tag = 'output window, operand 0, single buffered']
    #allocation3 [shape = 's32[1]{0}', space=sflag, size = 0x4, scoped, tag = 'scoped memory for deepmar_forward.1']
    %8 = vsyncpa [#allocation3], 0
    // Predicated region
    $region2: #{deepmar_forward.1} parent=1 // pred_check
      _
    $region3: #{deepmar_forward.1} parent=1 // pred_check_branch
      %10 = sbr.rel (0) target = $region5
    $region4: #{deepmar_forward.1} parent=1 // pred_region
      _
    $region5: #{deepmar_forward.1} parent=1 // pred_fallthru
      _
    // Predicated region
    $region6: #{deepmar_forward.1} parent=1 // pred_check
      _
    $region7: #{deepmar_forward.1} parent=1 // pred_check_branch
      %12 = sbr.rel (0) target = $region9
    $region8: #{deepmar_forward.1} parent=1 // pred_region
      _
    $region9: #{deepmar_forward.1} parent=1 // pred_fallthru
      _
    // Predicated region
    $region10: #{deepmar_forward.1} parent=1 // pred_check
      _
    $region11: #{deepmar_forward.1} parent=1 // pred_check_branch
      %14 = sbr.rel (0) target = $region13
    $region12: #{deepmar_forward.1} parent=1 // pred_region
      _
    $region13: #{deepmar_forward.1} parent=1 // pred_fallthru
      _
    %v15 = vld [vmem:[%s0] sm:$0x7f]
    %v16 = vld [vmem:[%s0 + $0x8] sm:$0x7f]
    %v17 = vld [vmem:[%s0 + $0x10] sm:$0x7f]
    %v18 = vld [vmem:[%s0 + $0x18] sm:$0x7f]
    %v19 = vld [vmem:[%s0 + $0x20] sm:$0x7f]
    %v20 = vld [vmem:[%s0 + $0x28] sm:$0x7f]
    %v21 = vld [vmem:[%s0 + $0x30] sm:$0x7f]
    %v22 = vld [vmem:[%s0 + $0x38] sm:$0x7f]
    %v23 = vld [vmem:[%s0 + $0x40] sm:$0x7f]
    %v24 = vld [vmem:[%s0 + $0x48] sm:$0x7f]
    %v25 = vld [vmem:[%s0 + $0x50] sm:$0x7f]
    %v26 = vld [vmem:[%s0 + $0x58] sm:$0x7f]
    %v27 = vld [vmem:[%s0 + $0x60] sm:$0x7f]
    %v28 = vld [vmem:[%s0 + $0x68] sm:$0x7f]
    %v29 = vld [vmem:[%s0 + $0x70] sm:$0x7f]
    %v30 = vld [vmem:[%s0 + $0x78] sm:$0x7f]
    %v31 = vld [vmem:[%s0 + $0x380] sm:$0x7f]
    %v32 = vld [vmem:[%s0 + $0x388] sm:$0x7f]
    %v33 = vld [vmem:[%s0 + $0x390] sm:$0x7f]
    %v34 = vld [vmem:[%s0 + $0x398] sm:$0x7f]
    %v35 = vld [vmem:[%s0 + $0x3a0] sm:$0x7f]
    %v36 = vld [vmem:[%s0 + $0x3a8] sm:$0x7f]
    %v37 = vld [vmem:[%s0 + $0x3b0] sm:$0x7f]
    %v38 = vld [vmem:[%s0 + $0x3b8] sm:$0x7f]
    %v39 = vld [vmem:[%s0 + $0x3c0] sm:$0x7f]
    %v40 = vld [vmem:[%s0 + $0x3c8] sm:$0x7f]
    %v41 = vld [vmem:[%s0 + $0x3d0] sm:$0x7f]
    %v42 = vld [vmem:[%s0 + $0x3d8] sm:$0x7f]
    %v43 = vld [vmem:[%s0 + $0x3e0] sm:$0x7f]
    %v44 = vld [vmem:[%s0 + $0x3e8] sm:$0x7f]
    %v45 = vld [vmem:[%s0 + $0x3f0] sm:$0x7f]
    %v46 = vld [vmem:[%s0 + $0x3f8] sm:$0x7f]
    %vm47 = vcmask 1046528
    %v48 = vsel %vm47, %v15, 0.0
    %v49 = vrot.slane %v48, 4
    %v50 = vadd.f32 %v48, %v49
    %v51 = vrot.slane %v50, 2
    %v52 = vadd.f32 %v50, %v51
    %v53 = vrot.slane %v52, 1
    %v54 = vadd.f32 %v52, %v53
    %v55 = vsel %vm47, %v16, 0.0
    %v56 = vrot.slane %v55, 4
    %v57 = vadd.f32 %v55, %v56
    %v58 = vrot.slane %v57, 2
    %v59 = vadd.f32 %v57, %v58
    %v60 = vrot.slane %v59, 1
    %v61 = vadd.f32 %v59, %v60
    %v62 = vsel %vm47, %v17, 0.0
    %v63 = vrot.slane %v62, 4
    %v64 = vadd.f32 %v62, %v63
    %v65 = vrot.slane %v64, 2
    %v66 = vadd.f32 %v64, %v65
    %v67 = vrot.slane %v66, 1
    %v68 = vadd.f32 %v66, %v67
    %v69 = vsel %vm47, %v18, 0.0
    %v70 = vrot.slane %v69, 4
    %v71 = vadd.f32 %v69, %v70
    %v72 = vrot.slane %v71, 2
    %v73 = vadd.f32 %v71, %v72
    %v74 = vrot.slane %v73, 1
    %v75 = vadd.f32 %v73, %v74
    %v76 = vsel %vm47, %v19, 0.0
    %v77 = vrot.slane %v76, 4
    %v78 = vadd.f32 %v76, %v77
    %v79 = vrot.slane %v78, 2
    %v80 = vadd.f32 %v78, %v79
    %v81 = vrot.slane %v80, 1
    %v82 = vadd.f32 %v80, %v81
    %v83 = vsel %vm47, %v20, 0.0
    %v84 = vrot.slane %v83, 4
    %v85 = vadd.f32 %v83, %v84
    %v86 = vrot.slane %v85, 2
    %v87 = vadd.f32 %v85, %v86
    %v88 = vrot.slane %v87, 1
    %v89 = vadd.f32 %v87, %v88
    %v90 = vsel %vm47, %v21, 0.0
    %v91 = vrot.slane %v90, 4
    %v92 = vadd.f32 %v90, %v91
    %v93 = vrot.slane %v92, 2
    %v94 = vadd.f32 %v92, %v93
    %v95 = vrot.slane %v94, 1
    %v96 = vadd.f32 %v94, %v95
    %v97 = vsel %vm47, %v22, 0.0
    %v98 = vrot.slane %v97, 4
    %v99 = vadd.f32 %v97, %v98
    %v100 = vrot.slane %v99, 2
    %v101 = vadd.f32 %v99, %v100
    %v102 = vrot.slane %v101, 1
    %v103 = vadd.f32 %v101, %v102
    %v104 = vsel %vm47, %v23, 0.0
    %v105 = vrot.slane %v104, 4
    %v106 = vadd.f32 %v104, %v105
    %v107 = vrot.slane %v106, 2
    %v108 = vadd.f32 %v106, %v107
    %v109 = vrot.slane %v108, 1
    %v110 = vadd.f32 %v108, %v109
    %v111 = vsel %vm47, %v24, 0.0
    %v112 = vrot.slane %v111, 4
    %v113 = vadd.f32 %v111, %v112
    %v114 = vrot.slane %v113, 2
    %v115 = vadd.f32 %v113, %v114
    %v116 = vrot.slane %v115, 1
    %v117 = vadd.f32 %v115, %v116
    %v118 = vsel %vm47, %v25, 0.0
    %v119 = vrot.slane %v118, 4
    %v120 = vadd.f32 %v118, %v119
    %v121 = vrot.slane %v120, 2
    %v122 = vadd.f32 %v120, %v121
    %v123 = vrot.slane %v122, 1
    %v124 = vadd.f32 %v122, %v123
    %v125 = vsel %vm47, %v26, 0.0
    %v126 = vrot.slane %v125, 4
    %v127 = vadd.f32 %v125, %v126
    %v128 = vrot.slane %v127, 2
    %v129 = vadd.f32 %v127, %v128
    %v130 = vrot.slane %v129, 1
    %v131 = vadd.f32 %v129, %v130
    %v132 = vsel %vm47, %v27, 0.0
    %v133 = vrot.slane %v132, 4
    %v134 = vadd.f32 %v132, %v133
    %v135 = vrot.slane %v134, 2
    %v136 = vadd.f32 %v134, %v135
    %v137 = vrot.slane %v136, 1
    %v138 = vadd.f32 %v136, %v137
    %v139 = vsel %vm47, %v28, 0.0
    %v140 = vrot.slane %v139, 4
    %v141 = vadd.f32 %v139, %v140
    %v142 = vrot.slane %v141, 2
    %v143 = vadd.f32 %v141, %v142
    %v144 = vrot.slane %v143, 1
    %v145 = vadd.f32 %v143, %v144
    %v146 = vsel %vm47, %v29, 0.0
    %v147 = vrot.slane %v146, 4
    %v148 = vadd.f32 %v146, %v147
    %v149 = vrot.slane %v148, 2
    %v150 = vadd.f32 %v148, %v149
    %v151 = vrot.slane %v150, 1
    %v152 = vadd.f32 %v150, %v151
    %v153 = vsel %vm47, %v30, 0.0
    %v154 = vrot.slane %v153, 4
    %v155 = vadd.f32 %v153, %v154
    %v156 = vrot.slane %v155, 2
    %v157 = vadd.f32 %v155, %v156
    %v158 = vrot.slane %v157, 1
    %v159 = vadd.f32 %v157, %v158
    %v160 = vsel %vm47, %v31, 0.0
    %v161 = vrot.slane %v160, 4
    %v162 = vadd.f32 %v160, %v161
    %v163 = vrot.slane %v162, 2
    %v164 = vadd.f32 %v162, %v163
    %v165 = vrot.slane %v164, 1
    %v166 = vadd.f32 %v164, %v165
    %v167 = vsel %vm47, %v32, 0.0
    %v168 = vrot.slane %v167, 4
    %v169 = vadd.f32 %v167, %v168
    %v170 = vrot.slane %v169, 2
    %v171 = vadd.f32 %v169, %v170
    %v172 = vrot.slane %v171, 1
    %v173 = vadd.f32 %v171, %v172
    %v174 = vsel %vm47, %v33, 0.0
    %v175 = vrot.slane %v174, 4
    %v176 = vadd.f32 %v174, %v175
    %v177 = vrot.slane %v176, 2
    %v178 = vadd.f32 %v176, %v177
    %v179 = vrot.slane %v178, 1
    %v180 = vadd.f32 %v178, %v179
    %v181 = vsel %vm47, %v34, 0.0
    %v182 = vrot.slane %v181, 4
    %v183 = vadd.f32 %v181, %v182
    %v184 = vrot.slane %v183, 2
    %v185 = vadd.f32 %v183, %v184
    %v186 = vrot.slane %v185, 1
    %v187 = vadd.f32 %v185, %v186
    %v188 = vsel %vm47, %v35, 0.0
    %v189 = vrot.slane %v188, 4
    %v190 = vadd.f32 %v188, %v189
    %v191 = vrot.slane %v190, 2
    %v192 = vadd.f32 %v190, %v191
    %v193 = vrot.slane %v192, 1
    %v194 = vadd.f32 %v192, %v193
    %v195 = vsel %vm47, %v36, 0.0
    %v196 = vrot.slane %v195, 4
    %v197 = vadd.f32 %v195, %v196
    %v198 = vrot.slane %v197, 2
    %v199 = vadd.f32 %v197, %v198
    %v200 = vrot.slane %v199, 1
    %v201 = vadd.f32 %v199, %v200
    %v202 = vsel %vm47, %v37, 0.0
    %v203 = vrot.slane %v202, 4
    %v204 = vadd.f32 %v202, %v203
    %v205 = vrot.slane %v204, 2
    %v206 = vadd.f32 %v204, %v205
    %v207 = vrot.slane %v206, 1
    %v208 = vadd.f32 %v206, %v207
    %v209 = vsel %vm47, %v38, 0.0
    %v210 = vrot.slane %v209, 4
    %v211 = vadd.f32 %v209, %v210
    %v212 = vrot.slane %v211, 2
    %v213 = vadd.f32 %v211, %v212
    %v214 = vrot.slane %v213, 1
    %v215 = vadd.f32 %v213, %v214
    %v216 = vsel %vm47, %v39, 0.0
    %v217 = vrot.slane %v216, 4
    %v218 = vadd.f32 %v216, %v217
    %v219 = vrot.slane %v218, 2
    %v220 = vadd.f32 %v218, %v219
    %v221 = vrot.slane %v220, 1
    %v222 = vadd.f32 %v220, %v221
    %v223 = vsel %vm47, %v40, 0.0
    %v224 = vrot.slane %v223, 4
    %v225 = vadd.f32 %v223, %v224
    %v226 = vrot.slane %v225, 2
    %v227 = vadd.f32 %v225, %v226
    %v228 = vrot.slane %v227, 1
    %v229 = vadd.f32 %v227, %v228
    %v230 = vsel %vm47, %v41, 0.0
    %v231 = vrot.slane %v230, 4
    %v232 = vadd.f32 %v230, %v231
    %v233 = vrot.slane %v232, 2
    %v234 = vadd.f32 %v232, %v233
    %v235 = vrot.slane %v234, 1
    %v236 = vadd.f32 %v234, %v235
    %v237 = vsel %vm47, %v42, 0.0
    %v238 = vrot.slane %v237, 4
    %v239 = vadd.f32 %v237, %v238
    %v240 = vrot.slane %v239, 2
    %v241 = vadd.f32 %v239, %v240
    %v242 = vrot.slane %v241, 1
    %v243 = vadd.f32 %v241, %v242
    %v244 = vsel %vm47, %v43, 0.0
    %v245 = vrot.slane %v244, 4
    %v246 = vadd.f32 %v244, %v245
    %v247 = vrot.slane %v246, 2
    %v248 = vadd.f32 %v246, %v247
    %v249 = vrot.slane %v248, 1
    %v250 = vadd.f32 %v248, %v249
    %v251 = vsel %vm47, %v44, 0.0
    %v252 = vrot.slane %v251, 4
    %v253 = vadd.f32 %v251, %v252
    %v254 = vrot.slane %v253, 2
    %v255 = vadd.f32 %v253, %v254
    %v256 = vrot.slane %v255, 1
    %v257 = vadd.f32 %v255, %v256
    %v258 = vsel %vm47, %v45, 0.0
    %v259 = vrot.slane %v258, 4
    %v260 = vadd.f32 %v258, %v259
    %v261 = vrot.slane %v260, 2
    %v262 = vadd.f32 %v260, %v261
    %v263 = vrot.slane %v262, 1
    %v264 = vadd.f32 %v262, %v263
    %v265 = vsel %vm47, %v46, 0.0
    %v266 = vrot.slane %v265, 4
    %v267 = vadd.f32 %v265, %v266
    %v268 = vrot.slane %v267, 2
    %v269 = vadd.f32 %v267, %v268
    %v270 = vrot.slane %v269, 1
    %v271 = vadd.f32 %v269, %v270
    %s272 = scalar_lea.vmem %s0, 128
    %v273 = vld [vmem:[%s272] sm:$0x7f]
    %v274 = vld [vmem:[%s272 + $0x8] sm:$0x7f]
    %v275 = vld [vmem:[%s272 + $0x10] sm:$0x7f]
    %v276 = vld [vmem:[%s272 + $0x18] sm:$0x7f]
    %v277 = vld [vmem:[%s272 + $0x20] sm:$0x7f]
    %v278 = vld [vmem:[%s272 + $0x28] sm:$0x7f]
    %v279 = vld [vmem:[%s272 + $0x30] sm:$0x7f]
    %v280 = vld [vmem:[%s272 + $0x38] sm:$0x7f]
    %v281 = vld [vmem:[%s272 + $0x40] sm:$0x7f]
    %v282 = vld [vmem:[%s272 + $0x48] sm:$0x7f]
    %v283 = vld [vmem:[%s272 + $0x50] sm:$0x7f]
    %v284 = vld [vmem:[%s272 + $0x58] sm:$0x7f]
    %v285 = vld [vmem:[%s272 + $0x60] sm:$0x7f]
    %v286 = vld [vmem:[%s272 + $0x68] sm:$0x7f]
    %v287 = vld [vmem:[%s272 + $0x70] sm:$0x7f]
    %v288 = vld [vmem:[%s272 + $0x78] sm:$0x7f]
    %v289 = vld [vmem:[%s272 + $0x380] sm:$0x7f]
    %v290 = vld [vmem:[%s272 + $0x388] sm:$0x7f]
    %v291 = vld [vmem:[%s272 + $0x390] sm:$0x7f]
    %v292 = vld [vmem:[%s272 + $0x398] sm:$0x7f]
    %v293 = vld [vmem:[%s272 + $0x3a0] sm:$0x7f]
    %v294 = vld [vmem:[%s272 + $0x3a8] sm:$0x7f]
    %v295 = vld [vmem:[%s272 + $0x3b0] sm:$0x7f]
    %v296 = vld [vmem:[%s272 + $0x3b8] sm:$0x7f]
    %v297 = vld [vmem:[%s272 + $0x3c0] sm:$0x7f]
    %v298 = vld [vmem:[%s272 + $0x3c8] sm:$0x7f]
    %v299 = vld [vmem:[%s272 + $0x3d0] sm:$0x7f]
    %v300 = vld [vmem:[%s272 + $0x3d8] sm:$0x7f]
    %v301 = vld [vmem:[%s272 + $0x3e0] sm:$0x7f]
    %v302 = vld [vmem:[%s272 + $0x3e8] sm:$0x7f]
    %v303 = vld [vmem:[%s272 + $0x3f0] sm:$0x7f]
    %v304 = vld [vmem:[%s272 + $0x3f8] sm:$0x7f]
    %v305 = vsel %vm47, %v273, 0.0
    %v306 = vrot.slane %v305, 4
    %v307 = vadd.f32 %v305, %v306
    %v308 = vrot.slane %v307, 2
    %v309 = vadd.f32 %v307, %v308
    %v310 = vrot.slane %v309, 1
    %v311 = vadd.f32 %v309, %v310
    %v312 = vsel %vm47, %v274, 0.0
    %v313 = vrot.slane %v312, 4
    %v314 = vadd.f32 %v312, %v313
    %v315 = vrot.slane %v314, 2
    %v316 = vadd.f32 %v314, %v315
    %v317 = vrot.slane %v316, 1
    %v318 = vadd.f32 %v316, %v317
    %v319 = vsel %vm47, %v275, 0.0
    %v320 = vrot.slane %v319, 4
    %v321 = vadd.f32 %v319, %v320
    %v322 = vrot.slane %v321, 2
    %v323 = vadd.f32 %v321, %v322
    %v324 = vrot.slane %v323, 1
    %v325 = vadd.f32 %v323, %v324
    %v326 = vsel %vm47, %v276, 0.0
    %v327 = vrot.slane %v326, 4
    %v328 = vadd.f32 %v326, %v327
    %v329 = vrot.slane %v328, 2
    %v330 = vadd.f32 %v328, %v329
    %v331 = vrot.slane %v330, 1
    %v332 = vadd.f32 %v330, %v331
    %v333 = vsel %vm47, %v277, 0.0
    %v334 = vrot.slane %v333, 4
    %v335 = vadd.f32 %v333, %v334
    %v336 = vrot.slane %v335, 2
    %v337 = vadd.f32 %v335, %v336
    %v338 = vrot.slane %v337, 1
    %v339 = vadd.f32 %v337, %v338
    %v340 = vsel %vm47, %v278, 0.0
    %v341 = vrot.slane %v340, 4
    %v342 = vadd.f32 %v340, %v341
    %v343 = vrot.slane %v342, 2
    %v344 = vadd.f32 %v342, %v343
    %v345 = vrot.slane %v344, 1
    %v346 = vadd.f32 %v344, %v345
    %v347 = vsel %vm47, %v279, 0.0
    %v348 = vrot.slane %v347, 4
    %v349 = vadd.f32 %v347, %v348
    %v350 = vrot.slane %v349, 2
    %v351 = vadd.f32 %v349, %v350
    %v352 = vrot.slane %v351, 1
    %v353 = vadd.f32 %v351, %v352
    %v354 = vsel %vm47, %v280, 0.0
    %v355 = vrot.slane %v354, 4
    %v356 = vadd.f32 %v354, %v355
    %v357 = vrot.slane %v356, 2
    %v358 = vadd.f32 %v356, %v357
    %v359 = vrot.slane %v358, 1
    %v360 = vadd.f32 %v358, %v359
    %v361 = vsel %vm47, %v281, 0.0
    %v362 = vrot.slane %v361, 4
    %v363 = vadd.f32 %v361, %v362
    %v364 = vrot.slane %v363, 2
    %v365 = vadd.f32 %v363, %v364
    %v366 = vrot.slane %v365, 1
    %v367 = vadd.f32 %v365, %v366
    %v368 = vsel %vm47, %v282, 0.0
    %v369 = vrot.slane %v368, 4
    %v370 = vadd.f32 %v368, %v369
    %v371 = vrot.slane %v370, 2
    %v372 = vadd.f32 %v370, %v371
    %v373 = vrot.slane %v372, 1
    %v374 = vadd.f32 %v372, %v373
    %v375 = vsel %vm47, %v283, 0.0
    %v376 = vrot.slane %v375, 4
    %v377 = vadd.f32 %v375, %v376
    %v378 = vrot.slane %v377, 2
    %v379 = vadd.f32 %v377, %v378
    %v380 = vrot.slane %v379, 1
    %v381 = vadd.f32 %v379, %v380
    %v382 = vsel %vm47, %v284, 0.0
    %v383 = vrot.slane %v382, 4
    %v384 = vadd.f32 %v382, %v383
    %v385 = vrot.slane %v384, 2
    %v386 = vadd.f32 %v384, %v385
    %v387 = vrot.slane %v386, 1
    %v388 = vadd.f32 %v386, %v387
    %v389 = vsel %vm47, %v285, 0.0
    %v390 = vrot.slane %v389, 4
    %v391 = vadd.f32 %v389, %v390
    %v392 = vrot.slane %v391, 2
    %v393 = vadd.f32 %v391, %v392
    %v394 = vrot.slane %v393, 1
    %v395 = vadd.f32 %v393, %v394
    %v396 = vsel %vm47, %v286, 0.0
    %v397 = vrot.slane %v396, 4
    %v398 = vadd.f32 %v396, %v397
    %v399 = vrot.slane %v398, 2
    %v400 = vadd.f32 %v398, %v399
    %v401 = vrot.slane %v400, 1
    %v402 = vadd.f32 %v400, %v401
    %v403 = vsel %vm47, %v287, 0.0
    %v404 = vrot.slane %v403, 4
    %v405 = vadd.f32 %v403, %v404
    %v406 = vrot.slane %v405, 2
    %v407 = vadd.f32 %v405, %v406
    %v408 = vrot.slane %v407, 1
    %v409 = vadd.f32 %v407, %v408
    %v410 = vsel %vm47, %v288, 0.0
    %v411 = vrot.slane %v410, 4
    %v412 = vadd.f32 %v410, %v411
    %v413 = vrot.slane %v412, 2
    %v414 = vadd.f32 %v412, %v413
    %v415 = vrot.slane %v414, 1
    %v416 = vadd.f32 %v414, %v415
    %v417 = vsel %vm47, %v289, 0.0
    %v418 = vrot.slane %v417, 4
    %v419 = vadd.f32 %v417, %v418
    %v420 = vrot.slane %v419, 2
    %v421 = vadd.f32 %v419, %v420
    %v422 = vrot.slane %v421, 1
    %v423 = vadd.f32 %v421, %v422
    %v424 = vsel %vm47, %v290, 0.0
    %v425 = vrot.slane %v424, 4
    %v426 = vadd.f32 %v424, %v425
    %v427 = vrot.slane %v426, 2
    %v428 = vadd.f32 %v426, %v427
    %v429 = vrot.slane %v428, 1
    %v430 = vadd.f32 %v428, %v429
    %v431 = vsel %vm47, %v291, 0.0
    %v432 = vrot.slane %v431, 4
    %v433 = vadd.f32 %v431, %v432
    %v434 = vrot.slane %v433, 2
    %v435 = vadd.f32 %v433, %v434
    %v436 = vrot.slane %v435, 1
    %v437 = vadd.f32 %v435, %v436
    %v438 = vsel %vm47, %v292, 0.0
    %v439 = vrot.slane %v438, 4
    %v440 = vadd.f32 %v438, %v439
    %v441 = vrot.slane %v440, 2
    %v442 = vadd.f32 %v440, %v441
    %v443 = vrot.slane %v442, 1
    %v444 = vadd.f32 %v442, %v443
    %v445 = vsel %vm47, %v293, 0.0
    %v446 = vrot.slane %v445, 4
    %v447 = vadd.f32 %v445, %v446
    %v448 = vrot.slane %v447, 2
    %v449 = vadd.f32 %v447, %v448
    %v450 = vrot.slane %v449, 1
    %v451 = vadd.f32 %v449, %v450
    %v452 = vsel %vm47, %v294, 0.0
    %v453 = vrot.slane %v452, 4
    %v454 = vadd.f32 %v452, %v453
    %v455 = vrot.slane %v454, 2
    %v456 = vadd.f32 %v454, %v455
    %v457 = vrot.slane %v456, 1
    %v458 = vadd.f32 %v456, %v457
    %v459 = vsel %vm47, %v295, 0.0
    %v460 = vrot.slane %v459, 4
    %v461 = vadd.f32 %v459, %v460
    %v462 = vrot.slane %v461, 2
    %v463 = vadd.f32 %v461, %v462
    %v464 = vrot.slane %v463, 1
    %v465 = vadd.f32 %v463, %v464
    %v466 = vsel %vm47, %v296, 0.0
    %v467 = vrot.slane %v466, 4
    %v468 = vadd.f32 %v466, %v467
    %v469 = vrot.slane %v468, 2
    %v470 = vadd.f32 %v468, %v469
    %v471 = vrot.slane %v470, 1
    %v472 = vadd.f32 %v470, %v471
    %v473 = vsel %vm47, %v297, 0.0
    %v474 = vrot.slane %v473, 4
    %v475 = vadd.f32 %v473, %v474
    %v476 = vrot.slane %v475, 2
    %v477 = vadd.f32 %v475, %v476
    %v478 = vrot.slane %v477, 1
    %v479 = vadd.f32 %v477, %v478
    %v480 = vsel %vm47, %v298, 0.0
    %v481 = vrot.slane %v480, 4
    %v482 = vadd.f32 %v480, %v481
    %v483 = vrot.slane %v482, 2
    %v484 = vadd.f32 %v482, %v483
    %v485 = vrot.slane %v484, 1
    %v486 = vadd.f32 %v484, %v485
    %v487 = vsel %vm47, %v299, 0.0
    %v488 = vrot.slane %v487, 4
    %v489 = vadd.f32 %v487, %v488
    %v490 = vrot.slane %v489, 2
    %v491 = vadd.f32 %v489, %v490
    %v492 = vrot.slane %v491, 1
    %v493 = vadd.f32 %v491, %v492
    %v494 = vsel %vm47, %v300, 0.0
    %v495 = vrot.slane %v494, 4
    %v496 = vadd.f32 %v494, %v495
    %v497 = vrot.slane %v496, 2
    %v498 = vadd.f32 %v496, %v497
    %v499 = vrot.slane %v498, 1
    %v500 = vadd.f32 %v498, %v499
    %v501 = vsel %vm47, %v301, 0.0
    %v502 = vrot.slane %v501, 4
    %v503 = vadd.f32 %v501, %v502
    %v504 = vrot.slane %v503, 2
    %v505 = vadd.f32 %v503, %v504
    %v506 = vrot.slane %v505, 1
    %v507 = vadd.f32 %v505, %v506
    %v508 = vsel %vm47, %v302, 0.0
    %v509 = vrot.slane %v508, 4
    %v510 = vadd.f32 %v508, %v509
    %v511 = vrot.slane %v510, 2
    %v512 = vadd.f32 %v510, %v511
    %v513 = vrot.slane %v512, 1
    %v514 = vadd.f32 %v512, %v513
    %v515 = vsel %vm47, %v303, 0.0
    %v516 = vrot.slane %v515, 4
    %v517 = vadd.f32 %v515, %v516
    %v518 = vrot.slane %v517, 2
    %v519 = vadd.f32 %v517, %v518
    %v520 = vrot.slane %v519, 1
    %v521 = vadd.f32 %v519, %v520
    %v522 = vsel %vm47, %v304, 0.0
    %v523 = vrot.slane %v522, 4
    %v524 = vadd.f32 %v522, %v523
    %v525 = vrot.slane %v524, 2
    %v526 = vadd.f32 %v524, %v525
    %v527 = vrot.slane %v526, 1
    %v528 = vadd.f32 %v526, %v527
    %v529 = vadd.f32 %v54, %v311
    %v530 = vadd.f32 %v61, %v318
    %v531 = vadd.f32 %v68, %v325
    %v532 = vadd.f32 %v75, %v332
    %v533 = vadd.f32 %v82, %v339
    %v534 = vadd.f32 %v89, %v346
    %v535 = vadd.f32 %v96, %v353
    %v536 = vadd.f32 %v103, %v360
    %v537 = vadd.f32 %v110, %v367
    %v538 = vadd.f32 %v117, %v374
    %v539 = vadd.f32 %v124, %v381
    %v540 = vadd.f32 %v131, %v388
    %v541 = vadd.f32 %v138, %v395
    %v542 = vadd.f32 %v145, %v402
    %v543 = vadd.f32 %v152, %v409
    %v544 = vadd.f32 %v159, %v416
    %v545 = vadd.f32 %v166, %v423
    %v546 = vadd.f32 %v173, %v430
    %v547 = vadd.f32 %v180, %v437
    %v548 = vadd.f32 %v187, %v444
    %v549 = vadd.f32 %v194, %v451
    %v550 = vadd.f32 %v201, %v458
    %v551 = vadd.f32 %v208, %v465
    %v552 = vadd.f32 %v215, %v472
    %v553 = vadd.f32 %v222, %v479
    %v554 = vadd.f32 %v229, %v486
    %v555 = vadd.f32 %v236, %v493
    %v556 = vadd.f32 %v243, %v500
    %v557 = vadd.f32 %v250, %v507
    %v558 = vadd.f32 %v257, %v514
    %v559 = vadd.f32 %v264, %v521
    %v560 = vadd.f32 %v271, %v528
    %s561 = scalar_lea.vmem %s0, 256
    %v562 = vld [vmem:[%s561] sm:$0x7f]
    %v563 = vld [vmem:[%s561 + $0x8] sm:$0x7f]
    %v564 = vld [vmem:[%s561 + $0x10] sm:$0x7f]
    %v565 = vld [vmem:[%s561 + $0x18] sm:$0x7f]
    %v566 = vld [vmem:[%s561 + $0x20] sm:$0x7f]
    %v567 = vld [vmem:[%s561 + $0x28] sm:$0x7f]
    %v568 = vld [vmem:[%s561 + $0x30] sm:$0x7f]
    %v569 = vld [vmem:[%s561 + $0x38] sm:$0x7f]
    %v570 = vld [vmem:[%s561 + $0x40] sm:$0x7f]
    %v571 = vld [vmem:[%s561 + $0x48] sm:$0x7f]
    %v572 = vld [vmem:[%s561 + $0x50] sm:$0x7f]
    %v573 = vld [vmem:[%s561 + $0x58] sm:$0x7f]
    %v574 = vld [vmem:[%s561 + $0x60] sm:$0x7f]
    %v575 = vld [vmem:[%s561 + $0x68] sm:$0x7f]
    %v576 = vld [vmem:[%s561 + $0x70] sm:$0x7f]
    %v577 = vld [vmem:[%s561 + $0x78] sm:$0x7f]
    %v578 = vld [vmem:[%s561 + $0x380] sm:$0x7f]
    %v579 = vld [vmem:[%s561 + $0x388] sm:$0x7f]
    %v580 = vld [vmem:[%s561 + $0x390] sm:$0x7f]
    %v581 = vld [vmem:[%s561 + $0x398] sm:$0x7f]
    %v582 = vld [vmem:[%s561 + $0x3a0] sm:$0x7f]
    %v583 = vld [vmem:[%s561 + $0x3a8] sm:$0x7f]
    %v584 = vld [vmem:[%s561 + $0x3b0] sm:$0x7f]
    %v585 = vld [vmem:[%s561 + $0x3b8] sm:$0x7f]
    %v586 = vld [vmem:[%s561 + $0x3c0] sm:$0x7f]
    %v587 = vld [vmem:[%s561 + $0x3c8] sm:$0x7f]
    %v588 = vld [vmem:[%s561 + $0x3d0] sm:$0x7f]
    %v589 = vld [vmem:[%s561 + $0x3d8] sm:$0x7f]
    %v590 = vld [vmem:[%s561 + $0x3e0] sm:$0x7f]
    %v591 = vld [vmem:[%s561 + $0x3e8] sm:$0x7f]
    %v592 = vld [vmem:[%s561 + $0x3f0] sm:$0x7f]
    %v593 = vld [vmem:[%s561 + $0x3f8] sm:$0x7f]
    %v594 = vsel %vm47, %v562, 0.0
    %v595 = vrot.slane %v594, 4
    %v596 = vadd.f32 %v594, %v595
    %v597 = vrot.slane %v596, 2
    %v598 = vadd.f32 %v596, %v597
    %v599 = vrot.slane %v598, 1
    %v600 = vadd.f32 %v598, %v599
    %v601 = vsel %vm47, %v563, 0.0
    %v602 = vrot.slane %v601, 4
    %v603 = vadd.f32 %v601, %v602
    %v604 = vrot.slane %v603, 2
    %v605 = vadd.f32 %v603, %v604
    %v606 = vrot.slane %v605, 1
    %v607 = vadd.f32 %v605, %v606
    %v608 = vsel %vm47, %v564, 0.0
    %v609 = vrot.slane %v608, 4
    %v610 = vadd.f32 %v608, %v609
    %v611 = vrot.slane %v610, 2
    %v612 = vadd.f32 %v610, %v611
    %v613 = vrot.slane %v612, 1
    %v614 = vadd.f32 %v612, %v613
    %v615 = vsel %vm47, %v565, 0.0
    %v616 = vrot.slane %v615, 4
    %v617 = vadd.f32 %v615, %v616
    %v618 = vrot.slane %v617, 2
    %v619 = vadd.f32 %v617, %v618
    %v620 = vrot.slane %v619, 1
    %v621 = vadd.f32 %v619, %v620
    %v622 = vsel %vm47, %v566, 0.0
    %v623 = vrot.slane %v622, 4
    %v624 = vadd.f32 %v622, %v623
    %v625 = vrot.slane %v624, 2
    %v626 = vadd.f32 %v624, %v625
    %v627 = vrot.slane %v626, 1
    %v628 = vadd.f32 %v626, %v627
    %v629 = vsel %vm47, %v567, 0.0
    %v630 = vrot.slane %v629, 4
    %v631 = vadd.f32 %v629, %v630
    %v632 = vrot.slane %v631, 2
    %v633 = vadd.f32 %v631, %v632
    %v634 = vrot.slane %v633, 1
    %v635 = vadd.f32 %v633, %v634
    %v636 = vsel %vm47, %v568, 0.0
    %v637 = vrot.slane %v636, 4
    %v638 = vadd.f32 %v636, %v637
    %v639 = vrot.slane %v638, 2
    %v640 = vadd.f32 %v638, %v639
    %v641 = vrot.slane %v640, 1
    %v642 = vadd.f32 %v640, %v641
    %v643 = vsel %vm47, %v569, 0.0
    %v644 = vrot.slane %v643, 4
    %v645 = vadd.f32 %v643, %v644
    %v646 = vrot.slane %v645, 2
    %v647 = vadd.f32 %v645, %v646
    %v648 = vrot.slane %v647, 1
    %v649 = vadd.f32 %v647, %v648
    %v650 = vsel %vm47, %v570, 0.0
    %v651 = vrot.slane %v650, 4
    %v652 = vadd.f32 %v650, %v651
    %v653 = vrot.slane %v652, 2
    %v654 = vadd.f32 %v652, %v653
    %v655 = vrot.slane %v654, 1
    %v656 = vadd.f32 %v654, %v655
    %v657 = vsel %vm47, %v571, 0.0
    %v658 = vrot.slane %v657, 4
    %v659 = vadd.f32 %v657, %v658
    %v660 = vrot.slane %v659, 2
    %v661 = vadd.f32 %v659, %v660
    %v662 = vrot.slane %v661, 1
    %v663 = vadd.f32 %v661, %v662
    %v664 = vsel %vm47, %v572, 0.0
    %v665 = vrot.slane %v664, 4
    %v666 = vadd.f32 %v664, %v665
    %v667 = vrot.slane %v666, 2
    %v668 = vadd.f32 %v666, %v667
    %v669 = vrot.slane %v668, 1
    %v670 = vadd.f32 %v668, %v669
    %v671 = vsel %vm47, %v573, 0.0
    %v672 = vrot.slane %v671, 4
    %v673 = vadd.f32 %v671, %v672
    %v674 = vrot.slane %v673, 2
    %v675 = vadd.f32 %v673, %v674
    %v676 = vrot.slane %v675, 1
    %v677 = vadd.f32 %v675, %v676
    %v678 = vsel %vm47, %v574, 0.0
    %v679 = vrot.slane %v678, 4
    %v680 = vadd.f32 %v678, %v679
    %v681 = vrot.slane %v680, 2
    %v682 = vadd.f32 %v680, %v681
    %v683 = vrot.slane %v682, 1
    %v684 = vadd.f32 %v682, %v683
    %v685 = vsel %vm47, %v575, 0.0
    %v686 = vrot.slane %v685, 4
    %v687 = vadd.f32 %v685, %v686
    %v688 = vrot.slane %v687, 2
    %v689 = vadd.f32 %v687, %v688
    %v690 = vrot.slane %v689, 1
    %v691 = vadd.f32 %v689, %v690
    %v692 = vsel %vm47, %v576, 0.0
    %v693 = vrot.slane %v692, 4
    %v694 = vadd.f32 %v692, %v693
    %v695 = vrot.slane %v694, 2
    %v696 = vadd.f32 %v694, %v695
    %v697 = vrot.slane %v696, 1
    %v698 = vadd.f32 %v696, %v697
    %v699 = vsel %vm47, %v577, 0.0
    %v700 = vrot.slane %v699, 4
    %v701 = vadd.f32 %v699, %v700
    %v702 = vrot.slane %v701, 2
    %v703 = vadd.f32 %v701, %v702
    %v704 = vrot.slane %v703, 1
    %v705 = vadd.f32 %v703, %v704
    %v706 = vsel %vm47, %v578, 0.0
    %v707 = vrot.slane %v706, 4
    %v708 = vadd.f32 %v706, %v707
    %v709 = vrot.slane %v708, 2
    %v710 = vadd.f32 %v708, %v709
    %v711 = vrot.slane %v710, 1
    %v712 = vadd.f32 %v710, %v711
    %v713 = vsel %vm47, %v579, 0.0
    %v714 = vrot.slane %v713, 4
    %v715 = vadd.f32 %v713, %v714
    %v716 = vrot.slane %v715, 2
    %v717 = vadd.f32 %v715, %v716
    %v718 = vrot.slane %v717, 1
    %v719 = vadd.f32 %v717, %v718
    %v720 = vsel %vm47, %v580, 0.0
    %v721 = vrot.slane %v720, 4
    %v722 = vadd.f32 %v720, %v721
    %v723 = vrot.slane %v722, 2
    %v724 = vadd.f32 %v722, %v723
    %v725 = vrot.slane %v724, 1
    %v726 = vadd.f32 %v724, %v725
    %v727 = vsel %vm47, %v581, 0.0
    %v728 = vrot.slane %v727, 4
    %v729 = vadd.f32 %v727, %v728
    %v730 = vrot.slane %v729, 2
    %v731 = vadd.f32 %v729, %v730
    %v732 = vrot.slane %v731, 1
    %v733 = vadd.f32 %v731, %v732
    %v734 = vsel %vm47, %v582, 0.0
    %v735 = vrot.slane %v734, 4
    %v736 = vadd.f32 %v734, %v735
    %v737 = vrot.slane %v736, 2
    %v738 = vadd.f32 %v736, %v737
    %v739 = vrot.slane %v738, 1
    %v740 = vadd.f32 %v738, %v739
    %v741 = vsel %vm47, %v583, 0.0
    %v742 = vrot.slane %v741, 4
    %v743 = vadd.f32 %v741, %v742
    %v744 = vrot.slane %v743, 2
    %v745 = vadd.f32 %v743, %v744
    %v746 = vrot.slane %v745, 1
    %v747 = vadd.f32 %v745, %v746
    %v748 = vsel %vm47, %v584, 0.0
    %v749 = vrot.slane %v748, 4
    %v750 = vadd.f32 %v748, %v749
    %v751 = vrot.slane %v750, 2
    %v752 = vadd.f32 %v750, %v751
    %v753 = vrot.slane %v752, 1
    %v754 = vadd.f32 %v752, %v753
    %v755 = vsel %vm47, %v585, 0.0
    %v756 = vrot.slane %v755, 4
    %v757 = vadd.f32 %v755, %v756
    %v758 = vrot.slane %v757, 2
    %v759 = vadd.f32 %v757, %v758
    %v760 = vrot.slane %v759, 1
    %v761 = vadd.f32 %v759, %v760
    %v762 = vsel %vm47, %v586, 0.0
    %v763 = vrot.slane %v762, 4
    %v764 = vadd.f32 %v762, %v763
    %v765 = vrot.slane %v764, 2
    %v766 = vadd.f32 %v764, %v765
    %v767 = vrot.slane %v766, 1
    %v768 = vadd.f32 %v766, %v767
    %v769 = vsel %vm47, %v587, 0.0
    %v770 = vrot.slane %v769, 4
    %v771 = vadd.f32 %v769, %v770
    %v772 = vrot.slane %v771, 2
    %v773 = vadd.f32 %v771, %v772
    %v774 = vrot.slane %v773, 1
    %v775 = vadd.f32 %v773, %v774
    %v776 = vsel %vm47, %v588, 0.0
    %v777 = vrot.slane %v776, 4
    %v778 = vadd.f32 %v776, %v777
    %v779 = vrot.slane %v778, 2
    %v780 = vadd.f32 %v778, %v779
    %v781 = vrot.slane %v780, 1
    %v782 = vadd.f32 %v780, %v781
    %v783 = vsel %vm47, %v589, 0.0
    %v784 = vrot.slane %v783, 4
    %v785 = vadd.f32 %v783, %v784
    %v786 = vrot.slane %v785, 2
    %v787 = vadd.f32 %v785, %v786
    %v788 = vrot.slane %v787, 1
    %v789 = vadd.f32 %v787, %v788
    %v790 = vsel %vm47, %v590, 0.0
    %v791 = vrot.slane %v790, 4
    %v792 = vadd.f32 %v790, %v791
    %v793 = vrot.slane %v792, 2
    %v794 = vadd.f32 %v792, %v793
    %v795 = vrot.slane %v794, 1
    %v796 = vadd.f32 %v794, %v795
    %v797 = vsel %vm47, %v591, 0.0
    %v798 = vrot.slane %v797, 4
    %v799 = vadd.f32 %v797, %v798
    %v800 = vrot.slane %v799, 2
    %v801 = vadd.f32 %v799, %v800
    %v802 = vrot.slane %v801, 1
    %v803 = vadd.f32 %v801, %v802
    %v804 = vsel %vm47, %v592, 0.0
    %v805 = vrot.slane %v804, 4
    %v806 = vadd.f32 %v804, %v805
    %v807 = vrot.slane %v806, 2
    %v808 = vadd.f32 %v806, %v807
    %v809 = vrot.slane %v808, 1
    %v810 = vadd.f32 %v808, %v809
    %v811 = vsel %vm47, %v593, 0.0
    %v812 = vrot.slane %v811, 4
    %v813 = vadd.f32 %v811, %v812
    %v814 = vrot.slane %v813, 2
    %v815 = vadd.f32 %v813, %v814
    %v816 = vrot.slane %v815, 1
    %v817 = vadd.f32 %v815, %v816
    %v818 = vadd.f32 %v529, %v600
    %v819 = vadd.f32 %v530, %v607
    %v820 = vadd.f32 %v531, %v614
    %v821 = vadd.f32 %v532, %v621
    %v822 = vadd.f32 %v533, %v628
    %v823 = vadd.f32 %v534, %v635
    %v824 = vadd.f32 %v535, %v642
    %v825 = vadd.f32 %v536, %v649
    %v826 = vadd.f32 %v537, %v656
    %v827 = vadd.f32 %v538, %v663
    %v828 = vadd.f32 %v539, %v670
    %v829 = vadd.f32 %v540, %v677
    %v830 = vadd.f32 %v541, %v684
    %v831 = vadd.f32 %v542, %v691
    %v832 = vadd.f32 %v543, %v698
    %v833 = vadd.f32 %v544, %v705
    %v834 = vadd.f32 %v545, %v712
    %v835 = vadd.f32 %v546, %v719
    %v836 = vadd.f32 %v547, %v726
    %v837 = vadd.f32 %v548, %v733
    %v838 = vadd.f32 %v549, %v740
    %v839 = vadd.f32 %v550, %v747
    %v840 = vadd.f32 %v551, %v754
    %v841 = vadd.f32 %v552, %v761
    %v842 = vadd.f32 %v553, %v768
    %v843 = vadd.f32 %v554, %v775
    %v844 = vadd.f32 %v555, %v782
    %v845 = vadd.f32 %v556, %v789
    %v846 = vadd.f32 %v557, %v796
    %v847 = vadd.f32 %v558, %v803
    %v848 = vadd.f32 %v559, %v810
    %v849 = vadd.f32 %v560, %v817
    %s850 = scalar_lea.vmem %s0, 384
    %v851 = vld [vmem:[%s850] sm:$0x7f]
    %v852 = vld [vmem:[%s850 + $0x8] sm:$0x7f]
    %v853 = vld [vmem:[%s850 + $0x10] sm:$0x7f]
    %v854 = vld [vmem:[%s850 + $0x18] sm:$0x7f]
    %v855 = vld [vmem:[%s850 + $0x20] sm:$0x7f]
    %v856 = vld [vmem:[%s850 + $0x28] sm:$0x7f]
    %v857 = vld [vmem:[%s850 + $0x30] sm:$0x7f]
    %v858 = vld [vmem:[%s850 + $0x38] sm:$0x7f]
    %v859 = vld [vmem:[%s850 + $0x40] sm:$0x7f]
    %v860 = vld [vmem:[%s850 + $0x48] sm:$0x7f]
    %v861 = vld [vmem:[%s850 + $0x50] sm:$0x7f]
    %v862 = vld [vmem:[%s850 + $0x58] sm:$0x7f]
    %v863 = vld [vmem:[%s850 + $0x60] sm:$0x7f]
    %v864 = vld [vmem:[%s850 + $0x68] sm:$0x7f]
    %v865 = vld [vmem:[%s850 + $0x70] sm:$0x7f]
    %v866 = vld [vmem:[%s850 + $0x78] sm:$0x7f]
    %v867 = vld [vmem:[%s850 + $0x380] sm:$0x7f]
    %v868 = vld [vmem:[%s850 + $0x388] sm:$0x7f]
    %v869 = vld [vmem:[%s850 + $0x390] sm:$0x7f]
    %v870 = vld [vmem:[%s850 + $0x398] sm:$0x7f]
    %v871 = vld [vmem:[%s850 + $0x3a0] sm:$0x7f]
    %v872 = vld [vmem:[%s850 + $0x3a8] sm:$0x7f]
    %v873 = vld [vmem:[%s850 + $0x3b0] sm:$0x7f]
    %v874 = vld [vmem:[%s850 + $0x3b8] sm:$0x7f]
    %v875 = vld [vmem:[%s850 + $0x3c0] sm:$0x7f]
    %v876 = vld [vmem:[%s850 + $0x3c8] sm:$0x7f]
    %v877 = vld [vmem:[%s850 + $0x3d0] sm:$0x7f]
    %v878 = vld [vmem:[%s850 + $0x3d8] sm:$0x7f]
    %v879 = vld [vmem:[%s850 + $0x3e0] sm:$0x7f]
    %v880 = vld [vmem:[%s850 + $0x3e8] sm:$0x7f]
    %v881 = vld [vmem:[%s850 + $0x3f0] sm:$0x7f]
    %v882 = vld [vmem:[%s850 + $0x3f8] sm:$0x7f]
    %v883 = vsel %vm47, %v851, 0.0
    %v884 = vrot.slane %v883, 4
    %v885 = vadd.f32 %v883, %v884
    %v886 = vrot.slane %v885, 2
    %v887 = vadd.f32 %v885, %v886
    %v888 = vrot.slane %v887, 1
    %v889 = vadd.f32 %v887, %v888
    %v890 = vsel %vm47, %v852, 0.0
    %v891 = vrot.slane %v890, 4
    %v892 = vadd.f32 %v890, %v891
    %v893 = vrot.slane %v892, 2
    %v894 = vadd.f32 %v892, %v893
    %v895 = vrot.slane %v894, 1
    %v896 = vadd.f32 %v894, %v895
    %v897 = vsel %vm47, %v853, 0.0
    %v898 = vrot.slane %v897, 4
    %v899 = vadd.f32 %v897, %v898
    %v900 = vrot.slane %v899, 2
    %v901 = vadd.f32 %v899, %v900
    %v902 = vrot.slane %v901, 1
    %v903 = vadd.f32 %v901, %v902
    %v904 = vsel %vm47, %v854, 0.0
    %v905 = vrot.slane %v904, 4
    %v906 = vadd.f32 %v904, %v905
    %v907 = vrot.slane %v906, 2
    %v908 = vadd.f32 %v906, %v907
    %v909 = vrot.slane %v908, 1
    %v910 = vadd.f32 %v908, %v909
    %v911 = vsel %vm47, %v855, 0.0
    %v912 = vrot.slane %v911, 4
    %v913 = vadd.f32 %v911, %v912
    %v914 = vrot.slane %v913, 2
    %v915 = vadd.f32 %v913, %v914
    %v916 = vrot.slane %v915, 1
    %v917 = vadd.f32 %v915, %v916
    %v918 = vsel %vm47, %v856, 0.0
    %v919 = vrot.slane %v918, 4
    %v920 = vadd.f32 %v918, %v919
    %v921 = vrot.slane %v920, 2
    %v922 = vadd.f32 %v920, %v921
    %v923 = vrot.slane %v922, 1
    %v924 = vadd.f32 %v922, %v923
    %v925 = vsel %vm47, %v857, 0.0
    %v926 = vrot.slane %v925, 4
    %v927 = vadd.f32 %v925, %v926
    %v928 = vrot.slane %v927, 2
    %v929 = vadd.f32 %v927, %v928
    %v930 = vrot.slane %v929, 1
    %v931 = vadd.f32 %v929, %v930
    %v932 = vsel %vm47, %v858, 0.0
    %v933 = vrot.slane %v932, 4
    %v934 = vadd.f32 %v932, %v933
    %v935 = vrot.slane %v934, 2
    %v936 = vadd.f32 %v934, %v935
    %v937 = vrot.slane %v936, 1
    %v938 = vadd.f32 %v936, %v937
    %v939 = vsel %vm47, %v859, 0.0
    %v940 = vrot.slane %v939, 4
    %v941 = vadd.f32 %v939, %v940
    %v942 = vrot.slane %v941, 2
    %v943 = vadd.f32 %v941, %v942
    %v944 = vrot.slane %v943, 1
    %v945 = vadd.f32 %v943, %v944
    %v946 = vsel %vm47, %v860, 0.0
    %v947 = vrot.slane %v946, 4
    %v948 = vadd.f32 %v946, %v947
    %v949 = vrot.slane %v948, 2
    %v950 = vadd.f32 %v948, %v949
    %v951 = vrot.slane %v950, 1
    %v952 = vadd.f32 %v950, %v951
    %v953 = vsel %vm47, %v861, 0.0
    %v954 = vrot.slane %v953, 4
    %v955 = vadd.f32 %v953, %v954
    %v956 = vrot.slane %v955, 2
    %v957 = vadd.f32 %v955, %v956
    %v958 = vrot.slane %v957, 1
    %v959 = vadd.f32 %v957, %v958
    %v960 = vsel %vm47, %v862, 0.0
    %v961 = vrot.slane %v960, 4
    %v962 = vadd.f32 %v960, %v961
    %v963 = vrot.slane %v962, 2
    %v964 = vadd.f32 %v962, %v963
    %v965 = vrot.slane %v964, 1
    %v966 = vadd.f32 %v964, %v965
    %v967 = vsel %vm47, %v863, 0.0
    %v968 = vrot.slane %v967, 4
    %v969 = vadd.f32 %v967, %v968
    %v970 = vrot.slane %v969, 2
    %v971 = vadd.f32 %v969, %v970
    %v972 = vrot.slane %v971, 1
    %v973 = vadd.f32 %v971, %v972
    %v974 = vsel %vm47, %v864, 0.0
    %v975 = vrot.slane %v974, 4
    %v976 = vadd.f32 %v974, %v975
    %v977 = vrot.slane %v976, 2
    %v978 = vadd.f32 %v976, %v977
    %v979 = vrot.slane %v978, 1
    %v980 = vadd.f32 %v978, %v979
    %v981 = vsel %vm47, %v865, 0.0
    %v982 = vrot.slane %v981, 4
    %v983 = vadd.f32 %v981, %v982
    %v984 = vrot.slane %v983, 2
    %v985 = vadd.f32 %v983, %v984
    %v986 = vrot.slane %v985, 1
    %v987 = vadd.f32 %v985, %v986
    %v988 = vsel %vm47, %v866, 0.0
    %v989 = vrot.slane %v988, 4
    %v990 = vadd.f32 %v988, %v989
    %v991 = vrot.slane %v990, 2
    %v992 = vadd.f32 %v990, %v991
    %v993 = vrot.slane %v992, 1
    %v994 = vadd.f32 %v992, %v993
    %v995 = vsel %vm47, %v867, 0.0
    %v996 = vrot.slane %v995, 4
    %v997 = vadd.f32 %v995, %v996
    %v998 = vrot.slane %v997, 2
    %v999 = vadd.f32 %v997, %v998
    %v1000 = vrot.slane %v999, 1
    %v1001 = vadd.f32 %v999, %v1000
    %v1002 = vsel %vm47, %v868, 0.0
    %v1003 = vrot.slane %v1002, 4
    %v1004 = vadd.f32 %v1002, %v1003
    %v1005 = vrot.slane %v1004, 2
    %v1006 = vadd.f32 %v1004, %v1005
    %v1007 = vrot.slane %v1006, 1
    %v1008 = vadd.f32 %v1006, %v1007
    %v1009 = vsel %vm47, %v869, 0.0
    %v1010 = vrot.slane %v1009, 4
    %v1011 = vadd.f32 %v1009, %v1010
    %v1012 = vrot.slane %v1011, 2
    %v1013 = vadd.f32 %v1011, %v1012
    %v1014 = vrot.slane %v1013, 1
    %v1015 = vadd.f32 %v1013, %v1014
    %v1016 = vsel %vm47, %v870, 0.0
    %v1017 = vrot.slane %v1016, 4
    %v1018 = vadd.f32 %v1016, %v1017
    %v1019 = vrot.slane %v1018, 2
    %v1020 = vadd.f32 %v1018, %v1019
    %v1021 = vrot.slane %v1020, 1
    %v1022 = vadd.f32 %v1020, %v1021
    %v1023 = vsel %vm47, %v871, 0.0
    %v1024 = vrot.slane %v1023, 4
    %v1025 = vadd.f32 %v1023, %v1024
    %v1026 = vrot.slane %v1025, 2
    %v1027 = vadd.f32 %v1025, %v1026
    %v1028 = vrot.slane %v1027, 1
    %v1029 = vadd.f32 %v1027, %v1028
    %v1030 = vsel %vm47, %v872, 0.0
    %v1031 = vrot.slane %v1030, 4
    %v1032 = vadd.f32 %v1030, %v1031
    %v1033 = vrot.slane %v1032, 2
    %v1034 = vadd.f32 %v1032, %v1033
    %v1035 = vrot.slane %v1034, 1
    %v1036 = vadd.f32 %v1034, %v1035
    %v1037 = vsel %vm47, %v873, 0.0
    %v1038 = vrot.slane %v1037, 4
    %v1039 = vadd.f32 %v1037, %v1038
    %v1040 = vrot.slane %v1039, 2
    %v1041 = vadd.f32 %v1039, %v1040
    %v1042 = vrot.slane %v1041, 1
    %v1043 = vadd.f32 %v1041, %v1042
    %v1044 = vsel %vm47, %v874, 0.0
    %v1045 = vrot.slane %v1044, 4
    %v1046 = vadd.f32 %v1044, %v1045
    %v1047 = vrot.slane %v1046, 2
    %v1048 = vadd.f32 %v1046, %v1047
    %v1049 = vrot.slane %v1048, 1
    %v1050 = vadd.f32 %v1048, %v1049
    %v1051 = vsel %vm47, %v875, 0.0
    %v1052 = vrot.slane %v1051, 4
    %v1053 = vadd.f32 %v1051, %v1052
    %v1054 = vrot.slane %v1053, 2
    %v1055 = vadd.f32 %v1053, %v1054
    %v1056 = vrot.slane %v1055, 1
    %v1057 = vadd.f32 %v1055, %v1056
    %v1058 = vsel %vm47, %v876, 0.0
    %v1059 = vrot.slane %v1058, 4
    %v1060 = vadd.f32 %v1058, %v1059
    %v1061 = vrot.slane %v1060, 2
    %v1062 = vadd.f32 %v1060, %v1061
    %v1063 = vrot.slane %v1062, 1
    %v1064 = vadd.f32 %v1062, %v1063
    %v1065 = vsel %vm47, %v877, 0.0
    %v1066 = vrot.slane %v1065, 4
    %v1067 = vadd.f32 %v1065, %v1066
    %v1068 = vrot.slane %v1067, 2
    %v1069 = vadd.f32 %v1067, %v1068
    %v1070 = vrot.slane %v1069, 1
    %v1071 = vadd.f32 %v1069, %v1070
    %v1072 = vsel %vm47, %v878, 0.0
    %v1073 = vrot.slane %v1072, 4
    %v1074 = vadd.f32 %v1072, %v1073
    %v1075 = vrot.slane %v1074, 2
    %v1076 = vadd.f32 %v1074, %v1075
    %v1077 = vrot.slane %v1076, 1
    %v1078 = vadd.f32 %v1076, %v1077
    %v1079 = vsel %vm47, %v879, 0.0
    %v1080 = vrot.slane %v1079, 4
    %v1081 = vadd.f32 %v1079, %v1080
    %v1082 = vrot.slane %v1081, 2
    %v1083 = vadd.f32 %v1081, %v1082
    %v1084 = vrot.slane %v1083, 1
    %v1085 = vadd.f32 %v1083, %v1084
    %v1086 = vsel %vm47, %v880, 0.0
    %v1087 = vrot.slane %v1086, 4
    %v1088 = vadd.f32 %v1086, %v1087
    %v1089 = vrot.slane %v1088, 2
    %v1090 = vadd.f32 %v1088, %v1089
    %v1091 = vrot.slane %v1090, 1
    %v1092 = vadd.f32 %v1090, %v1091
    %v1093 = vsel %vm47, %v881, 0.0
    %v1094 = vrot.slane %v1093, 4
    %v1095 = vadd.f32 %v1093, %v1094
    %v1096 = vrot.slane %v1095, 2
    %v1097 = vadd.f32 %v1095, %v1096
    %v1098 = vrot.slane %v1097, 1
    %v1099 = vadd.f32 %v1097, %v1098
    %v1100 = vsel %vm47, %v882, 0.0
    %v1101 = vrot.slane %v1100, 4
    %v1102 = vadd.f32 %v1100, %v1101
    %v1103 = vrot.slane %v1102, 2
    %v1104 = vadd.f32 %v1102, %v1103
    %v1105 = vrot.slane %v1104, 1
    %v1106 = vadd.f32 %v1104, %v1105
    %v1107 = vadd.f32 %v818, %v889
    %v1108 = vadd.f32 %v819, %v896
    %v1109 = vadd.f32 %v820, %v903
    %v1110 = vadd.f32 %v821, %v910
    %v1111 = vadd.f32 %v822, %v917
    %v1112 = vadd.f32 %v823, %v924
    %v1113 = vadd.f32 %v824, %v931
    %v1114 = vadd.f32 %v825, %v938
    %v1115 = vadd.f32 %v826, %v945
    %v1116 = vadd.f32 %v827, %v952
    %v1117 = vadd.f32 %v828, %v959
    %v1118 = vadd.f32 %v829, %v966
    %v1119 = vadd.f32 %v830, %v973
    %v1120 = vadd.f32 %v831, %v980
    %v1121 = vadd.f32 %v832, %v987
    %v1122 = vadd.f32 %v833, %v994
    %v1123 = vadd.f32 %v834, %v1001
    %v1124 = vadd.f32 %v835, %v1008
    %v1125 = vadd.f32 %v836, %v1015
    %v1126 = vadd.f32 %v837, %v1022
    %v1127 = vadd.f32 %v838, %v1029
    %v1128 = vadd.f32 %v839, %v1036
    %v1129 = vadd.f32 %v840, %v1043
    %v1130 = vadd.f32 %v841, %v1050
    %v1131 = vadd.f32 %v842, %v1057
    %v1132 = vadd.f32 %v843, %v1064
    %v1133 = vadd.f32 %v844, %v1071
    %v1134 = vadd.f32 %v845, %v1078
    %v1135 = vadd.f32 %v846, %v1085
    %v1136 = vadd.f32 %v847, %v1092
    %v1137 = vadd.f32 %v848, %v1099
    %v1138 = vadd.f32 %v849, %v1106
    %s1139 = scalar_lea.vmem %s0, 512
    %v1140 = vld [vmem:[%s1139] sm:$0x7f]
    %v1141 = vld [vmem:[%s1139 + $0x8] sm:$0x7f]
    %v1142 = vld [vmem:[%s1139 + $0x10] sm:$0x7f]
    %v1143 = vld [vmem:[%s1139 + $0x18] sm:$0x7f]
    %v1144 = vld [vmem:[%s1139 + $0x20] sm:$0x7f]
    %v1145 = vld [vmem:[%s1139 + $0x28] sm:$0x7f]
    %v1146 = vld [vmem:[%s1139 + $0x30] sm:$0x7f]
    %v1147 = vld [vmem:[%s1139 + $0x38] sm:$0x7f]
    %v1148 = vld [vmem:[%s1139 + $0x40] sm:$0x7f]
    %v1149 = vld [vmem:[%s1139 + $0x48] sm:$0x7f]
    %v1150 = vld [vmem:[%s1139 + $0x50] sm:$0x7f]
    %v1151 = vld [vmem:[%s1139 + $0x58] sm:$0x7f]
    %v1152 = vld [vmem:[%s1139 + $0x60] sm:$0x7f]
    %v1153 = vld [vmem:[%s1139 + $0x68] sm:$0x7f]
    %v1154 = vld [vmem:[%s1139 + $0x70] sm:$0x7f]
    %v1155 = vld [vmem:[%s1139 + $0x78] sm:$0x7f]
    %v1156 = vld [vmem:[%s1139 + $0x380] sm:$0x7f]
    %v1157 = vld [vmem:[%s1139 + $0x388] sm:$0x7f]
    %v1158 = vld [vmem:[%s1139 + $0x390] sm:$0x7f]
    %v1159 = vld [vmem:[%s1139 + $0x398] sm:$0x7f]
    %v1160 = vld [vmem:[%s1139 + $0x3a0] sm:$0x7f]
    %v1161 = vld [vmem:[%s1139 + $0x3a8] sm:$0x7f]
    %v1162 = vld [vmem:[%s1139 + $0x3b0] sm:$0x7f]
    %v1163 = vld [vmem:[%s1139 + $0x3b8] sm:$0x7f]
    %v1164 = vld [vmem:[%s1139 + $0x3c0] sm:$0x7f]
    %v1165 = vld [vmem:[%s1139 + $0x3c8] sm:$0x7f]
    %v1166 = vld [vmem:[%s1139 + $0x3d0] sm:$0x7f]
    %v1167 = vld [vmem:[%s1139 + $0x3d8] sm:$0x7f]
    %v1168 = vld [vmem:[%s1139 + $0x3e0] sm:$0x7f]
    %v1169 = vld [vmem:[%s1139 + $0x3e8] sm:$0x7f]
    %v1170 = vld [vmem:[%s1139 + $0x3f0] sm:$0x7f]
    %v1171 = vld [vmem:[%s1139 + $0x3f8] sm:$0x7f]
    %v1172 = vsel %vm47, %v1140, 0.0
    %v1173 = vrot.slane %v1172, 4
    %v1174 = vadd.f32 %v1172, %v1173
    %v1175 = vrot.slane %v1174, 2
    %v1176 = vadd.f32 %v1174, %v1175
    %v1177 = vrot.slane %v1176, 1
    %v1178 = vadd.f32 %v1176, %v1177
    %v1179 = vsel %vm47, %v1141, 0.0
    %v1180 = vrot.slane %v1179, 4
    %v1181 = vadd.f32 %v1179, %v1180
    %v1182 = vrot.slane %v1181, 2
    %v1183 = vadd.f32 %v1181, %v1182
    %v1184 = vrot.slane %v1183, 1
    %v1185 = vadd.f32 %v1183, %v1184
    %v1186 = vsel %vm47, %v1142, 0.0
    %v1187 = vrot.slane %v1186, 4
    %v1188 = vadd.f32 %v1186, %v1187
    %v1189 = vrot.slane %v1188, 2
    %v1190 = vadd.f32 %v1188, %v1189
    %v1191 = vrot.slane %v1190, 1
    %v1192 = vadd.f32 %v1190, %v1191
    %v1193 = vsel %vm47, %v1143, 0.0
    %v1194 = vrot.slane %v1193, 4
    %v1195 = vadd.f32 %v1193, %v1194
    %v1196 = vrot.slane %v1195, 2
    %v1197 = vadd.f32 %v1195, %v1196
    %v1198 = vrot.slane %v1197, 1
    %v1199 = vadd.f32 %v1197, %v1198
    %v1200 = vsel %vm47, %v1144, 0.0
    %v1201 = vrot.slane %v1200, 4
    %v1202 = vadd.f32 %v1200, %v1201
    %v1203 = vrot.slane %v1202, 2
    %v1204 = vadd.f32 %v1202, %v1203
    %v1205 = vrot.slane %v1204, 1
    %v1206 = vadd.f32 %v1204, %v1205
    %v1207 = vsel %vm47, %v1145, 0.0
    %v1208 = vrot.slane %v1207, 4
    %v1209 = vadd.f32 %v1207, %v1208
    %v1210 = vrot.slane %v1209, 2
    %v1211 = vadd.f32 %v1209, %v1210
    %v1212 = vrot.slane %v1211, 1
    %v1213 = vadd.f32 %v1211, %v1212
    %v1214 = vsel %vm47, %v1146, 0.0
    %v1215 = vrot.slane %v1214, 4
    %v1216 = vadd.f32 %v1214, %v1215
    %v1217 = vrot.slane %v1216, 2
    %v1218 = vadd.f32 %v1216, %v1217
    %v1219 = vrot.slane %v1218, 1
    %v1220 = vadd.f32 %v1218, %v1219
    %v1221 = vsel %vm47, %v1147, 0.0
    %v1222 = vrot.slane %v1221, 4
    %v1223 = vadd.f32 %v1221, %v1222
    %v1224 = vrot.slane %v1223, 2
    %v1225 = vadd.f32 %v1223, %v1224
    %v1226 = vrot.slane %v1225, 1
    %v1227 = vadd.f32 %v1225, %v1226
    %v1228 = vsel %vm47, %v1148, 0.0
    %v1229 = vrot.slane %v1228, 4
    %v1230 = vadd.f32 %v1228, %v1229
    %v1231 = vrot.slane %v1230, 2
    %v1232 = vadd.f32 %v1230, %v1231
    %v1233 = vrot.slane %v1232, 1
    %v1234 = vadd.f32 %v1232, %v1233
    %v1235 = vsel %vm47, %v1149, 0.0
    %v1236 = vrot.slane %v1235, 4
    %v1237 = vadd.f32 %v1235, %v1236
    %v1238 = vrot.slane %v1237, 2
    %v1239 = vadd.f32 %v1237, %v1238
    %v1240 = vrot.slane %v1239, 1
    %v1241 = vadd.f32 %v1239, %v1240
    %v1242 = vsel %vm47, %v1150, 0.0
    %v1243 = vrot.slane %v1242, 4
    %v1244 = vadd.f32 %v1242, %v1243
    %v1245 = vrot.slane %v1244, 2
    %v1246 = vadd.f32 %v1244, %v1245
    %v1247 = vrot.slane %v1246, 1
    %v1248 = vadd.f32 %v1246, %v1247
    %v1249 = vsel %vm47, %v1151, 0.0
    %v1250 = vrot.slane %v1249, 4
    %v1251 = vadd.f32 %v1249, %v1250
    %v1252 = vrot.slane %v1251, 2
    %v1253 = vadd.f32 %v1251, %v1252
    %v1254 = vrot.slane %v1253, 1
    %v1255 = vadd.f32 %v1253, %v1254
    %v1256 = vsel %vm47, %v1152, 0.0
    %v1257 = vrot.slane %v1256, 4
    %v1258 = vadd.f32 %v1256, %v1257
    %v1259 = vrot.slane %v1258, 2
    %v1260 = vadd.f32 %v1258, %v1259
    %v1261 = vrot.slane %v1260, 1
    %v1262 = vadd.f32 %v1260, %v1261
    %v1263 = vsel %vm47, %v1153, 0.0
    %v1264 = vrot.slane %v1263, 4
    %v1265 = vadd.f32 %v1263, %v1264
    %v1266 = vrot.slane %v1265, 2
    %v1267 = vadd.f32 %v1265, %v1266
    %v1268 = vrot.slane %v1267, 1
    %v1269 = vadd.f32 %v1267, %v1268
    %v1270 = vsel %vm47, %v1154, 0.0
    %v1271 = vrot.slane %v1270, 4
    %v1272 = vadd.f32 %v1270, %v1271
    %v1273 = vrot.slane %v1272, 2
    %v1274 = vadd.f32 %v1272, %v1273
    %v1275 = vrot.slane %v1274, 1
    %v1276 = vadd.f32 %v1274, %v1275
    %v1277 = vsel %vm47, %v1155, 0.0
    %v1278 = vrot.slane %v1277, 4
    %v1279 = vadd.f32 %v1277, %v1278
    %v1280 = vrot.slane %v1279, 2
    %v1281 = vadd.f32 %v1279, %v1280
    %v1282 = vrot.slane %v1281, 1
    %v1283 = vadd.f32 %v1281, %v1282
    %v1284 = vsel %vm47, %v1156, 0.0
    %v1285 = vrot.slane %v1284, 4
    %v1286 = vadd.f32 %v1284, %v1285
    %v1287 = vrot.slane %v1286, 2
    %v1288 = vadd.f32 %v1286, %v1287
    %v1289 = vrot.slane %v1288, 1
    %v1290 = vadd.f32 %v1288, %v1289
    %v1291 = vsel %vm47, %v1157, 0.0
    %v1292 = vrot.slane %v1291, 4
    %v1293 = vadd.f32 %v1291, %v1292
    %v1294 = vrot.slane %v1293, 2
    %v1295 = vadd.f32 %v1293, %v1294
    %v1296 = vrot.slane %v1295, 1
    %v1297 = vadd.f32 %v1295, %v1296
    %v1298 = vsel %vm47, %v1158, 0.0
    %v1299 = vrot.slane %v1298, 4
    %v1300 = vadd.f32 %v1298, %v1299
    %v1301 = vrot.slane %v1300, 2
    %v1302 = vadd.f32 %v1300, %v1301
    %v1303 = vrot.slane %v1302, 1
    %v1304 = vadd.f32 %v1302, %v1303
    %v1305 = vsel %vm47, %v1159, 0.0
    %v1306 = vrot.slane %v1305, 4
    %v1307 = vadd.f32 %v1305, %v1306
    %v1308 = vrot.slane %v1307, 2
    %v1309 = vadd.f32 %v1307, %v1308
    %v1310 = vrot.slane %v1309, 1
    %v1311 = vadd.f32 %v1309, %v1310
    %v1312 = vsel %vm47, %v1160, 0.0
    %v1313 = vrot.slane %v1312, 4
    %v1314 = vadd.f32 %v1312, %v1313
    %v1315 = vrot.slane %v1314, 2
    %v1316 = vadd.f32 %v1314, %v1315
    %v1317 = vrot.slane %v1316, 1
    %v1318 = vadd.f32 %v1316, %v1317
    %v1319 = vsel %vm47, %v1161, 0.0
    %v1320 = vrot.slane %v1319, 4
    %v1321 = vadd.f32 %v1319, %v1320
    %v1322 = vrot.slane %v1321, 2
    %v1323 = vadd.f32 %v1321, %v1322
    %v1324 = vrot.slane %v1323, 1
    %v1325 = vadd.f32 %v1323, %v1324
    %v1326 = vsel %vm47, %v1162, 0.0
    %v1327 = vrot.slane %v1326, 4
    %v1328 = vadd.f32 %v1326, %v1327
    %v1329 = vrot.slane %v1328, 2
    %v1330 = vadd.f32 %v1328, %v1329
    %v1331 = vrot.slane %v1330, 1
    %v1332 = vadd.f32 %v1330, %v1331
    %v1333 = vsel %vm47, %v1163, 0.0
    %v1334 = vrot.slane %v1333, 4
    %v1335 = vadd.f32 %v1333, %v1334
    %v1336 = vrot.slane %v1335, 2
    %v1337 = vadd.f32 %v1335, %v1336
    %v1338 = vrot.slane %v1337, 1
    %v1339 = vadd.f32 %v1337, %v1338
    %v1340 = vsel %vm47, %v1164, 0.0
    %v1341 = vrot.slane %v1340, 4
    %v1342 = vadd.f32 %v1340, %v1341
    %v1343 = vrot.slane %v1342, 2
    %v1344 = vadd.f32 %v1342, %v1343
    %v1345 = vrot.slane %v1344, 1
    %v1346 = vadd.f32 %v1344, %v1345
    %v1347 = vsel %vm47, %v1165, 0.0
    %v1348 = vrot.slane %v1347, 4
    %v1349 = vadd.f32 %v1347, %v1348
    %v1350 = vrot.slane %v1349, 2
    %v1351 = vadd.f32 %v1349, %v1350
    %v1352 = vrot.slane %v1351, 1
    %v1353 = vadd.f32 %v1351, %v1352
    %v1354 = vsel %vm47, %v1166, 0.0
    %v1355 = vrot.slane %v1354, 4
    %v1356 = vadd.f32 %v1354, %v1355
    %v1357 = vrot.slane %v1356, 2
    %v1358 = vadd.f32 %v1356, %v1357
    %v1359 = vrot.slane %v1358, 1
    %v1360 = vadd.f32 %v1358, %v1359
    %v1361 = vsel %vm47, %v1167, 0.0
    %v1362 = vrot.slane %v1361, 4
    %v1363 = vadd.f32 %v1361, %v1362
    %v1364 = vrot.slane %v1363, 2
    %v1365 = vadd.f32 %v1363, %v1364
    %v1366 = vrot.slane %v1365, 1
    %v1367 = vadd.f32 %v1365, %v1366
    %v1368 = vsel %vm47, %v1168, 0.0
    %v1369 = vrot.slane %v1368, 4
    %v1370 = vadd.f32 %v1368, %v1369
    %v1371 = vrot.slane %v1370, 2
    %v1372 = vadd.f32 %v1370, %v1371
    %v1373 = vrot.slane %v1372, 1
    %v1374 = vadd.f32 %v1372, %v1373
    %v1375 = vsel %vm47, %v1169, 0.0
    %v1376 = vrot.slane %v1375, 4
    %v1377 = vadd.f32 %v1375, %v1376
    %v1378 = vrot.slane %v1377, 2
    %v1379 = vadd.f32 %v1377, %v1378
    %v1380 = vrot.slane %v1379, 1
    %v1381 = vadd.f32 %v1379, %v1380
    %v1382 = vsel %vm47, %v1170, 0.0
    %v1383 = vrot.slane %v1382, 4
    %v1384 = vadd.f32 %v1382, %v1383
    %v1385 = vrot.slane %v1384, 2
    %v1386 = vadd.f32 %v1384, %v1385
    %v1387 = vrot.slane %v1386, 1
    %v1388 = vadd.f32 %v1386, %v1387
    %v1389 = vsel %vm47, %v1171, 0.0
    %v1390 = vrot.slane %v1389, 4
    %v1391 = vadd.f32 %v1389, %v1390
    %v1392 = vrot.slane %v1391, 2
    %v1393 = vadd.f32 %v1391, %v1392
    %v1394 = vrot.slane %v1393, 1
    %v1395 = vadd.f32 %v1393, %v1394
    %v1396 = vadd.f32 %v1107, %v1178
    %v1397 = vadd.f32 %v1108, %v1185
    %v1398 = vadd.f32 %v1109, %v1192
    %v1399 = vadd.f32 %v1110, %v1199
    %v1400 = vadd.f32 %v1111, %v1206
    %v1401 = vadd.f32 %v1112, %v1213
    %v1402 = vadd.f32 %v1113, %v1220
    %v1403 = vadd.f32 %v1114, %v1227
    %v1404 = vadd.f32 %v1115, %v1234
    %v1405 = vadd.f32 %v1116, %v1241
    %v1406 = vadd.f32 %v1117, %v1248
    %v1407 = vadd.f32 %v1118, %v1255
    %v1408 = vadd.f32 %v1119, %v1262
    %v1409 = vadd.f32 %v1120, %v1269
    %v1410 = vadd.f32 %v1121, %v1276
    %v1411 = vadd.f32 %v1122, %v1283
    %v1412 = vadd.f32 %v1123, %v1290
    %v1413 = vadd.f32 %v1124, %v1297
    %v1414 = vadd.f32 %v1125, %v1304
    %v1415 = vadd.f32 %v1126, %v1311
    %v1416 = vadd.f32 %v1127, %v1318
    %v1417 = vadd.f32 %v1128, %v1325
    %v1418 = vadd.f32 %v1129, %v1332
    %v1419 = vadd.f32 %v1130, %v1339
    %v1420 = vadd.f32 %v1131, %v1346
    %v1421 = vadd.f32 %v1132, %v1353
    %v1422 = vadd.f32 %v1133, %v1360
    %v1423 = vadd.f32 %v1134, %v1367
    %v1424 = vadd.f32 %v1135, %v1374
    %v1425 = vadd.f32 %v1136, %v1381
    %v1426 = vadd.f32 %v1137, %v1388
    %v1427 = vadd.f32 %v1138, %v1395
    %s1428 = scalar_lea.vmem %s0, 640
    %v1429 = vld [vmem:[%s1428] sm:$0x7f]
    %v1430 = vld [vmem:[%s1428 + $0x8] sm:$0x7f]
    %v1431 = vld [vmem:[%s1428 + $0x10] sm:$0x7f]
    %v1432 = vld [vmem:[%s1428 + $0x18] sm:$0x7f]
    %v1433 = vld [vmem:[%s1428 + $0x20] sm:$0x7f]
    %v1434 = vld [vmem:[%s1428 + $0x28] sm:$0x7f]
    %v1435 = vld [vmem:[%s1428 + $0x30] sm:$0x7f]
    %v1436 = vld [vmem:[%s1428 + $0x38] sm:$0x7f]
    %v1437 = vld [vmem:[%s1428 + $0x40] sm:$0x7f]
    %v1438 = vld [vmem:[%s1428 + $0x48] sm:$0x7f]
    %v1439 = vld [vmem:[%s1428 + $0x50] sm:$0x7f]
    %v1440 = vld [vmem:[%s1428 + $0x58] sm:$0x7f]
    %v1441 = vld [vmem:[%s1428 + $0x60] sm:$0x7f]
    %v1442 = vld [vmem:[%s1428 + $0x68] sm:$0x7f]
    %v1443 = vld [vmem:[%s1428 + $0x70] sm:$0x7f]
    %v1444 = vld [vmem:[%s1428 + $0x78] sm:$0x7f]
    %v1445 = vld [vmem:[%s1428 + $0x380] sm:$0x7f]
    %v1446 = vld [vmem:[%s1428 + $0x388] sm:$0x7f]
    %v1447 = vld [vmem:[%s1428 + $0x390] sm:$0x7f]
    %v1448 = vld [vmem:[%s1428 + $0x398] sm:$0x7f]
    %v1449 = vld [vmem:[%s1428 + $0x3a0] sm:$0x7f]
    %v1450 = vld [vmem:[%s1428 + $0x3a8] sm:$0x7f]
    %v1451 = vld [vmem:[%s1428 + $0x3b0] sm:$0x7f]
    %v1452 = vld [vmem:[%s1428 + $0x3b8] sm:$0x7f]
    %v1453 = vld [vmem:[%s1428 + $0x3c0] sm:$0x7f]
    %v1454 = vld [vmem:[%s1428 + $0x3c8] sm:$0x7f]
    %v1455 = vld [vmem:[%s1428 + $0x3d0] sm:$0x7f]
    %v1456 = vld [vmem:[%s1428 + $0x3d8] sm:$0x7f]
    %v1457 = vld [vmem:[%s1428 + $0x3e0] sm:$0x7f]
    %v1458 = vld [vmem:[%s1428 + $0x3e8] sm:$0x7f]
    %v1459 = vld [vmem:[%s1428 + $0x3f0] sm:$0x7f]
    %v1460 = vld [vmem:[%s1428 + $0x3f8] sm:$0x7f]
    %v1461 = vsel %vm47, %v1429, 0.0
    %v1462 = vrot.slane %v1461, 4
    %v1463 = vadd.f32 %v1461, %v1462
    %v1464 = vrot.slane %v1463, 2
    %v1465 = vadd.f32 %v1463, %v1464
    %v1466 = vrot.slane %v1465, 1
    %v1467 = vadd.f32 %v1465, %v1466
    %v1468 = vsel %vm47, %v1430, 0.0
    %v1469 = vrot.slane %v1468, 4
    %v1470 = vadd.f32 %v1468, %v1469
    %v1471 = vrot.slane %v1470, 2
    %v1472 = vadd.f32 %v1470, %v1471
    %v1473 = vrot.slane %v1472, 1
    %v1474 = vadd.f32 %v1472, %v1473
    %v1475 = vsel %vm47, %v1431, 0.0
    %v1476 = vrot.slane %v1475, 4
    %v1477 = vadd.f32 %v1475, %v1476
    %v1478 = vrot.slane %v1477, 2
    %v1479 = vadd.f32 %v1477, %v1478
    %v1480 = vrot.slane %v1479, 1
    %v1481 = vadd.f32 %v1479, %v1480
    %v1482 = vsel %vm47, %v1432, 0.0
    %v1483 = vrot.slane %v1482, 4
    %v1484 = vadd.f32 %v1482, %v1483
    %v1485 = vrot.slane %v1484, 2
    %v1486 = vadd.f32 %v1484, %v1485
    %v1487 = vrot.slane %v1486, 1
    %v1488 = vadd.f32 %v1486, %v1487
    %v1489 = vsel %vm47, %v1433, 0.0
    %v1490 = vrot.slane %v1489, 4
    %v1491 = vadd.f32 %v1489, %v1490
    %v1492 = vrot.slane %v1491, 2
    %v1493 = vadd.f32 %v1491, %v1492
    %v1494 = vrot.slane %v1493, 1
    %v1495 = vadd.f32 %v1493, %v1494
    %v1496 = vsel %vm47, %v1434, 0.0
    %v1497 = vrot.slane %v1496, 4
    %v1498 = vadd.f32 %v1496, %v1497
    %v1499 = vrot.slane %v1498, 2
    %v1500 = vadd.f32 %v1498, %v1499
    %v1501 = vrot.slane %v1500, 1
    %v1502 = vadd.f32 %v1500, %v1501
    %v1503 = vsel %vm47, %v1435, 0.0
    %v1504 = vrot.slane %v1503, 4
    %v1505 = vadd.f32 %v1503, %v1504
    %v1506 = vrot.slane %v1505, 2
    %v1507 = vadd.f32 %v1505, %v1506
    %v1508 = vrot.slane %v1507, 1
    %v1509 = vadd.f32 %v1507, %v1508
    %v1510 = vsel %vm47, %v1436, 0.0
    %v1511 = vrot.slane %v1510, 4
    %v1512 = vadd.f32 %v1510, %v1511
    %v1513 = vrot.slane %v1512, 2
    %v1514 = vadd.f32 %v1512, %v1513
    %v1515 = vrot.slane %v1514, 1
    %v1516 = vadd.f32 %v1514, %v1515
    %v1517 = vsel %vm47, %v1437, 0.0
    %v1518 = vrot.slane %v1517, 4
    %v1519 = vadd.f32 %v1517, %v1518
    %v1520 = vrot.slane %v1519, 2
    %v1521 = vadd.f32 %v1519, %v1520
    %v1522 = vrot.slane %v1521, 1
    %v1523 = vadd.f32 %v1521, %v1522
    %v1524 = vsel %vm47, %v1438, 0.0
    %v1525 = vrot.slane %v1524, 4
    %v1526 = vadd.f32 %v1524, %v1525
    %v1527 = vrot.slane %v1526, 2
    %v1528 = vadd.f32 %v1526, %v1527
    %v1529 = vrot.slane %v1528, 1
    %v1530 = vadd.f32 %v1528, %v1529
    %v1531 = vsel %vm47, %v1439, 0.0
    %v1532 = vrot.slane %v1531, 4
    %v1533 = vadd.f32 %v1531, %v1532
    %v1534 = vrot.slane %v1533, 2
    %v1535 = vadd.f32 %v1533, %v1534
    %v1536 = vrot.slane %v1535, 1
    %v1537 = vadd.f32 %v1535, %v1536
    %v1538 = vsel %vm47, %v1440, 0.0
    %v1539 = vrot.slane %v1538, 4
    %v1540 = vadd.f32 %v1538, %v1539
    %v1541 = vrot.slane %v1540, 2
    %v1542 = vadd.f32 %v1540, %v1541
    %v1543 = vrot.slane %v1542, 1
    %v1544 = vadd.f32 %v1542, %v1543
    %v1545 = vsel %vm47, %v1441, 0.0
    %v1546 = vrot.slane %v1545, 4
    %v1547 = vadd.f32 %v1545, %v1546
    %v1548 = vrot.slane %v1547, 2
    %v1549 = vadd.f32 %v1547, %v1548
    %v1550 = vrot.slane %v1549, 1
    %v1551 = vadd.f32 %v1549, %v1550
    %v1552 = vsel %vm47, %v1442, 0.0
    %v1553 = vrot.slane %v1552, 4
    %v1554 = vadd.f32 %v1552, %v1553
    %v1555 = vrot.slane %v1554, 2
    %v1556 = vadd.f32 %v1554, %v1555
    %v1557 = vrot.slane %v1556, 1
    %v1558 = vadd.f32 %v1556, %v1557
    %v1559 = vsel %vm47, %v1443, 0.0
    %v1560 = vrot.slane %v1559, 4
    %v1561 = vadd.f32 %v1559, %v1560
    %v1562 = vrot.slane %v1561, 2
    %v1563 = vadd.f32 %v1561, %v1562
    %v1564 = vrot.slane %v1563, 1
    %v1565 = vadd.f32 %v1563, %v1564
    %v1566 = vsel %vm47, %v1444, 0.0
    %v1567 = vrot.slane %v1566, 4
    %v1568 = vadd.f32 %v1566, %v1567
    %v1569 = vrot.slane %v1568, 2
    %v1570 = vadd.f32 %v1568, %v1569
    %v1571 = vrot.slane %v1570, 1
    %v1572 = vadd.f32 %v1570, %v1571
    %v1573 = vsel %vm47, %v1445, 0.0
    %v1574 = vrot.slane %v1573, 4
    %v1575 = vadd.f32 %v1573, %v1574
    %v1576 = vrot.slane %v1575, 2
    %v1577 = vadd.f32 %v1575, %v1576
    %v1578 = vrot.slane %v1577, 1
    %v1579 = vadd.f32 %v1577, %v1578
    %v1580 = vsel %vm47, %v1446, 0.0
    %v1581 = vrot.slane %v1580, 4
    %v1582 = vadd.f32 %v1580, %v1581
    %v1583 = vrot.slane %v1582, 2
    %v1584 = vadd.f32 %v1582, %v1583
    %v1585 = vrot.slane %v1584, 1
    %v1586 = vadd.f32 %v1584, %v1585
    %v1587 = vsel %vm47, %v1447, 0.0
    %v1588 = vrot.slane %v1587, 4
    %v1589 = vadd.f32 %v1587, %v1588
    %v1590 = vrot.slane %v1589, 2
    %v1591 = vadd.f32 %v1589, %v1590
    %v1592 = vrot.slane %v1591, 1
    %v1593 = vadd.f32 %v1591, %v1592
    %v1594 = vsel %vm47, %v1448, 0.0
    %v1595 = vrot.slane %v1594, 4
    %v1596 = vadd.f32 %v1594, %v1595
    %v1597 = vrot.slane %v1596, 2
    %v1598 = vadd.f32 %v1596, %v1597
    %v1599 = vrot.slane %v1598, 1
    %v1600 = vadd.f32 %v1598, %v1599
    %v1601 = vsel %vm47, %v1449, 0.0
    %v1602 = vrot.slane %v1601, 4
    %v1603 = vadd.f32 %v1601, %v1602
    %v1604 = vrot.slane %v1603, 2
    %v1605 = vadd.f32 %v1603, %v1604
    %v1606 = vrot.slane %v1605, 1
    %v1607 = vadd.f32 %v1605, %v1606
    %v1608 = vsel %vm47, %v1450, 0.0
    %v1609 = vrot.slane %v1608, 4
    %v1610 = vadd.f32 %v1608, %v1609
    %v1611 = vrot.slane %v1610, 2
    %v1612 = vadd.f32 %v1610, %v1611
    %v1613 = vrot.slane %v1612, 1
    %v1614 = vadd.f32 %v1612, %v1613
    %v1615 = vsel %vm47, %v1451, 0.0
    %v1616 = vrot.slane %v1615, 4
    %v1617 = vadd.f32 %v1615, %v1616
    %v1618 = vrot.slane %v1617, 2
    %v1619 = vadd.f32 %v1617, %v1618
    %v1620 = vrot.slane %v1619, 1
    %v1621 = vadd.f32 %v1619, %v1620
    %v1622 = vsel %vm47, %v1452, 0.0
    %v1623 = vrot.slane %v1622, 4
    %v1624 = vadd.f32 %v1622, %v1623
    %v1625 = vrot.slane %v1624, 2
    %v1626 = vadd.f32 %v1624, %v1625
    %v1627 = vrot.slane %v1626, 1
    %v1628 = vadd.f32 %v1626, %v1627
    %v1629 = vsel %vm47, %v1453, 0.0
    %v1630 = vrot.slane %v1629, 4
    %v1631 = vadd.f32 %v1629, %v1630
    %v1632 = vrot.slane %v1631, 2
    %v1633 = vadd.f32 %v1631, %v1632
    %v1634 = vrot.slane %v1633, 1
    %v1635 = vadd.f32 %v1633, %v1634
    %v1636 = vsel %vm47, %v1454, 0.0
    %v1637 = vrot.slane %v1636, 4
    %v1638 = vadd.f32 %v1636, %v1637
    %v1639 = vrot.slane %v1638, 2
    %v1640 = vadd.f32 %v1638, %v1639
    %v1641 = vrot.slane %v1640, 1
    %v1642 = vadd.f32 %v1640, %v1641
    %v1643 = vsel %vm47, %v1455, 0.0
    %v1644 = vrot.slane %v1643, 4
    %v1645 = vadd.f32 %v1643, %v1644
    %v1646 = vrot.slane %v1645, 2
    %v1647 = vadd.f32 %v1645, %v1646
    %v1648 = vrot.slane %v1647, 1
    %v1649 = vadd.f32 %v1647, %v1648
    %v1650 = vsel %vm47, %v1456, 0.0
    %v1651 = vrot.slane %v1650, 4
    %v1652 = vadd.f32 %v1650, %v1651
    %v1653 = vrot.slane %v1652, 2
    %v1654 = vadd.f32 %v1652, %v1653
    %v1655 = vrot.slane %v1654, 1
    %v1656 = vadd.f32 %v1654, %v1655
    %v1657 = vsel %vm47, %v1457, 0.0
    %v1658 = vrot.slane %v1657, 4
    %v1659 = vadd.f32 %v1657, %v1658
    %v1660 = vrot.slane %v1659, 2
    %v1661 = vadd.f32 %v1659, %v1660
    %v1662 = vrot.slane %v1661, 1
    %v1663 = vadd.f32 %v1661, %v1662
    %v1664 = vsel %vm47, %v1458, 0.0
    %v1665 = vrot.slane %v1664, 4
    %v1666 = vadd.f32 %v1664, %v1665
    %v1667 = vrot.slane %v1666, 2
    %v1668 = vadd.f32 %v1666, %v1667
    %v1669 = vrot.slane %v1668, 1
    %v1670 = vadd.f32 %v1668, %v1669
    %v1671 = vsel %vm47, %v1459, 0.0
    %v1672 = vrot.slane %v1671, 4
    %v1673 = vadd.f32 %v1671, %v1672
    %v1674 = vrot.slane %v1673, 2
    %v1675 = vadd.f32 %v1673, %v1674
    %v1676 = vrot.slane %v1675, 1
    %v1677 = vadd.f32 %v1675, %v1676
    %v1678 = vsel %vm47, %v1460, 0.0
    %v1679 = vrot.slane %v1678, 4
    %v1680 = vadd.f32 %v1678, %v1679
    %v1681 = vrot.slane %v1680, 2
    %v1682 = vadd.f32 %v1680, %v1681
    %v1683 = vrot.slane %v1682, 1
    %v1684 = vadd.f32 %v1682, %v1683
    %v1685 = vadd.f32 %v1396, %v1467
    %v1686 = vadd.f32 %v1397, %v1474
    %v1687 = vadd.f32 %v1398, %v1481
    %v1688 = vadd.f32 %v1399, %v1488
    %v1689 = vadd.f32 %v1400, %v1495
    %v1690 = vadd.f32 %v1401, %v1502
    %v1691 = vadd.f32 %v1402, %v1509
    %v1692 = vadd.f32 %v1403, %v1516
    %v1693 = vadd.f32 %v1404, %v1523
    %v1694 = vadd.f32 %v1405, %v1530
    %v1695 = vadd.f32 %v1406, %v1537
    %v1696 = vadd.f32 %v1407, %v1544
    %v1697 = vadd.f32 %v1408, %v1551
    %v1698 = vadd.f32 %v1409, %v1558
    %v1699 = vadd.f32 %v1410, %v1565
    %v1700 = vadd.f32 %v1411, %v1572
    %v1701 = vadd.f32 %v1412, %v1579
    %v1702 = vadd.f32 %v1413, %v1586
    %v1703 = vadd.f32 %v1414, %v1593
    %v1704 = vadd.f32 %v1415, %v1600
    %v1705 = vadd.f32 %v1416, %v1607
    %v1706 = vadd.f32 %v1417, %v1614
    %v1707 = vadd.f32 %v1418, %v1621
    %v1708 = vadd.f32 %v1419, %v1628
    %v1709 = vadd.f32 %v1420, %v1635
    %v1710 = vadd.f32 %v1421, %v1642
    %v1711 = vadd.f32 %v1422, %v1649
    %v1712 = vadd.f32 %v1423, %v1656
    %v1713 = vadd.f32 %v1424, %v1663
    %v1714 = vadd.f32 %v1425, %v1670
    %v1715 = vadd.f32 %v1426, %v1677
    %v1716 = vadd.f32 %v1427, %v1684
    %s1717 = scalar_lea.vmem %s0, 768
    %v1718 = vld [vmem:[%s1717] sm:$0x7f]
    %v1719 = vld [vmem:[%s1717 + $0x8] sm:$0x7f]
    %v1720 = vld [vmem:[%s1717 + $0x10] sm:$0x7f]
    %v1721 = vld [vmem:[%s1717 + $0x18] sm:$0x7f]
    %v1722 = vld [vmem:[%s1717 + $0x20] sm:$0x7f]
    %v1723 = vld [vmem:[%s1717 + $0x28] sm:$0x7f]
    %v1724 = vld [vmem:[%s1717 + $0x30] sm:$0x7f]
    %v1725 = vld [vmem:[%s1717 + $0x38] sm:$0x7f]
    %v1726 = vld [vmem:[%s1717 + $0x40] sm:$0x7f]
    %v1727 = vld [vmem:[%s1717 + $0x48] sm:$0x7f]
    %v1728 = vld [vmem:[%s1717 + $0x50] sm:$0x7f]
    %v1729 = vld [vmem:[%s1717 + $0x58] sm:$0x7f]
    %v1730 = vld [vmem:[%s1717 + $0x60] sm:$0x7f]
    %v1731 = vld [vmem:[%s1717 + $0x68] sm:$0x7f]
    %v1732 = vld [vmem:[%s1717 + $0x70] sm:$0x7f]
    %v1733 = vld [vmem:[%s1717 + $0x78] sm:$0x7f]
    %v1734 = vld [vmem:[%s1717 + $0x380] sm:$0x7f]
    %v1735 = vld [vmem:[%s1717 + $0x388] sm:$0x7f]
    %v1736 = vld [vmem:[%s1717 + $0x390] sm:$0x7f]
    %v1737 = vld [vmem:[%s1717 + $0x398] sm:$0x7f]
    %v1738 = vld [vmem:[%s1717 + $0x3a0] sm:$0x7f]
    %v1739 = vld [vmem:[%s1717 + $0x3a8] sm:$0x7f]
    %v1740 = vld [vmem:[%s1717 + $0x3b0] sm:$0x7f]
    %v1741 = vld [vmem:[%s1717 + $0x3b8] sm:$0x7f]
    %v1742 = vld [vmem:[%s1717 + $0x3c0] sm:$0x7f]
    %v1743 = vld [vmem:[%s1717 + $0x3c8] sm:$0x7f]
    %v1744 = vld [vmem:[%s1717 + $0x3d0] sm:$0x7f]
    %v1745 = vld [vmem:[%s1717 + $0x3d8] sm:$0x7f]
    %v1746 = vld [vmem:[%s1717 + $0x3e0] sm:$0x7f]
    %v1747 = vld [vmem:[%s1717 + $0x3e8] sm:$0x7f]
    %v1748 = vld [vmem:[%s1717 + $0x3f0] sm:$0x7f]
    %v1749 = vld [vmem:[%s1717 + $0x3f8] sm:$0x7f]
    %v1750 = vsel %vm47, %v1718, 0.0
    %v1751 = vrot.slane %v1750, 4
    %v1752 = vadd.f32 %v1750, %v1751
    %v1753 = vrot.slane %v1752, 2
    %v1754 = vadd.f32 %v1752, %v1753
    %v1755 = vrot.slane %v1754, 1
    %v1756 = vadd.f32 %v1754, %v1755
    %v1757 = vsel %vm47, %v1719, 0.0
    %v1758 = vrot.slane %v1757, 4
    %v1759 = vadd.f32 %v1757, %v1758
    %v1760 = vrot.slane %v1759, 2
    %v1761 = vadd.f32 %v1759, %v1760
    %v1762 = vrot.slane %v1761, 1
    %v1763 = vadd.f32 %v1761, %v1762
    %v1764 = vsel %vm47, %v1720, 0.0
    %v1765 = vrot.slane %v1764, 4
    %v1766 = vadd.f32 %v1764, %v1765
    %v1767 = vrot.slane %v1766, 2
    %v1768 = vadd.f32 %v1766, %v1767
    %v1769 = vrot.slane %v1768, 1
    %v1770 = vadd.f32 %v1768, %v1769
    %v1771 = vsel %vm47, %v1721, 0.0
    %v1772 = vrot.slane %v1771, 4
    %v1773 = vadd.f32 %v1771, %v1772
    %v1774 = vrot.slane %v1773, 2
    %v1775 = vadd.f32 %v1773, %v1774
    %v1776 = vrot.slane %v1775, 1
    %v1777 = vadd.f32 %v1775, %v1776
    %v1778 = vsel %vm47, %v1722, 0.0
    %v1779 = vrot.slane %v1778, 4
    %v1780 = vadd.f32 %v1778, %v1779
    %v1781 = vrot.slane %v1780, 2
    %v1782 = vadd.f32 %v1780, %v1781
    %v1783 = vrot.slane %v1782, 1
    %v1784 = vadd.f32 %v1782, %v1783
    %v1785 = vsel %vm47, %v1723, 0.0
    %v1786 = vrot.slane %v1785, 4
    %v1787 = vadd.f32 %v1785, %v1786
    %v1788 = vrot.slane %v1787, 2
    %v1789 = vadd.f32 %v1787, %v1788
    %v1790 = vrot.slane %v1789, 1
    %v1791 = vadd.f32 %v1789, %v1790
    %v1792 = vsel %vm47, %v1724, 0.0
    %v1793 = vrot.slane %v1792, 4
    %v1794 = vadd.f32 %v1792, %v1793
    %v1795 = vrot.slane %v1794, 2
    %v1796 = vadd.f32 %v1794, %v1795
    %v1797 = vrot.slane %v1796, 1
    %v1798 = vadd.f32 %v1796, %v1797
    %v1799 = vsel %vm47, %v1725, 0.0
    %v1800 = vrot.slane %v1799, 4
    %v1801 = vadd.f32 %v1799, %v1800
    %v1802 = vrot.slane %v1801, 2
    %v1803 = vadd.f32 %v1801, %v1802
    %v1804 = vrot.slane %v1803, 1
    %v1805 = vadd.f32 %v1803, %v1804
    %v1806 = vsel %vm47, %v1726, 0.0
    %v1807 = vrot.slane %v1806, 4
    %v1808 = vadd.f32 %v1806, %v1807
    %v1809 = vrot.slane %v1808, 2
    %v1810 = vadd.f32 %v1808, %v1809
    %v1811 = vrot.slane %v1810, 1
    %v1812 = vadd.f32 %v1810, %v1811
    %v1813 = vsel %vm47, %v1727, 0.0
    %v1814 = vrot.slane %v1813, 4
    %v1815 = vadd.f32 %v1813, %v1814
    %v1816 = vrot.slane %v1815, 2
    %v1817 = vadd.f32 %v1815, %v1816
    %v1818 = vrot.slane %v1817, 1
    %v1819 = vadd.f32 %v1817, %v1818
    %v1820 = vsel %vm47, %v1728, 0.0
    %v1821 = vrot.slane %v1820, 4
    %v1822 = vadd.f32 %v1820, %v1821
    %v1823 = vrot.slane %v1822, 2
    %v1824 = vadd.f32 %v1822, %v1823
    %v1825 = vrot.slane %v1824, 1
    %v1826 = vadd.f32 %v1824, %v1825
    %v1827 = vsel %vm47, %v1729, 0.0
    %v1828 = vrot.slane %v1827, 4
    %v1829 = vadd.f32 %v1827, %v1828
    %v1830 = vrot.slane %v1829, 2
    %v1831 = vadd.f32 %v1829, %v1830
    %v1832 = vrot.slane %v1831, 1
    %v1833 = vadd.f32 %v1831, %v1832
    %v1834 = vsel %vm47, %v1730, 0.0
    %v1835 = vrot.slane %v1834, 4
    %v1836 = vadd.f32 %v1834, %v1835
    %v1837 = vrot.slane %v1836, 2
    %v1838 = vadd.f32 %v1836, %v1837
    %v1839 = vrot.slane %v1838, 1
    %v1840 = vadd.f32 %v1838, %v1839
    %v1841 = vsel %vm47, %v1731, 0.0
    %v1842 = vrot.slane %v1841, 4
    %v1843 = vadd.f32 %v1841, %v1842
    %v1844 = vrot.slane %v1843, 2
    %v1845 = vadd.f32 %v1843, %v1844
    %v1846 = vrot.slane %v1845, 1
    %v1847 = vadd.f32 %v1845, %v1846
    %v1848 = vsel %vm47, %v1732, 0.0
    %v1849 = vrot.slane %v1848, 4
    %v1850 = vadd.f32 %v1848, %v1849
    %v1851 = vrot.slane %v1850, 2
    %v1852 = vadd.f32 %v1850, %v1851
    %v1853 = vrot.slane %v1852, 1
    %v1854 = vadd.f32 %v1852, %v1853
    %v1855 = vsel %vm47, %v1733, 0.0
    %v1856 = vrot.slane %v1855, 4
    %v1857 = vadd.f32 %v1855, %v1856
    %v1858 = vrot.slane %v1857, 2
    %v1859 = vadd.f32 %v1857, %v1858
    %v1860 = vrot.slane %v1859, 1
    %v1861 = vadd.f32 %v1859, %v1860
    %v1862 = vsel %vm47, %v1734, 0.0
    %v1863 = vrot.slane %v1862, 4
    %v1864 = vadd.f32 %v1862, %v1863
    %v1865 = vrot.slane %v1864, 2
    %v1866 = vadd.f32 %v1864, %v1865
    %v1867 = vrot.slane %v1866, 1
    %v1868 = vadd.f32 %v1866, %v1867
    %v1869 = vsel %vm47, %v1735, 0.0
    %v1870 = vrot.slane %v1869, 4
    %v1871 = vadd.f32 %v1869, %v1870
    %v1872 = vrot.slane %v1871, 2
    %v1873 = vadd.f32 %v1871, %v1872
    %v1874 = vrot.slane %v1873, 1
    %v1875 = vadd.f32 %v1873, %v1874
    %v1876 = vsel %vm47, %v1736, 0.0
    %v1877 = vrot.slane %v1876, 4
    %v1878 = vadd.f32 %v1876, %v1877
    %v1879 = vrot.slane %v1878, 2
    %v1880 = vadd.f32 %v1878, %v1879
    %v1881 = vrot.slane %v1880, 1
    %v1882 = vadd.f32 %v1880, %v1881
    %v1883 = vsel %vm47, %v1737, 0.0
    %v1884 = vrot.slane %v1883, 4
    %v1885 = vadd.f32 %v1883, %v1884
    %v1886 = vrot.slane %v1885, 2
    %v1887 = vadd.f32 %v1885, %v1886
    %v1888 = vrot.slane %v1887, 1
    %v1889 = vadd.f32 %v1887, %v1888
    %v1890 = vsel %vm47, %v1738, 0.0
    %v1891 = vrot.slane %v1890, 4
    %v1892 = vadd.f32 %v1890, %v1891
    %v1893 = vrot.slane %v1892, 2
    %v1894 = vadd.f32 %v1892, %v1893
    %v1895 = vrot.slane %v1894, 1
    %v1896 = vadd.f32 %v1894, %v1895
    %v1897 = vsel %vm47, %v1739, 0.0
    %v1898 = vrot.slane %v1897, 4
    %v1899 = vadd.f32 %v1897, %v1898
    %v1900 = vrot.slane %v1899, 2
    %v1901 = vadd.f32 %v1899, %v1900
    %v1902 = vrot.slane %v1901, 1
    %v1903 = vadd.f32 %v1901, %v1902
    %v1904 = vsel %vm47, %v1740, 0.0
    %v1905 = vrot.slane %v1904, 4
    %v1906 = vadd.f32 %v1904, %v1905
    %v1907 = vrot.slane %v1906, 2
    %v1908 = vadd.f32 %v1906, %v1907
    %v1909 = vrot.slane %v1908, 1
    %v1910 = vadd.f32 %v1908, %v1909
    %v1911 = vsel %vm47, %v1741, 0.0
    %v1912 = vrot.slane %v1911, 4
    %v1913 = vadd.f32 %v1911, %v1912
    %v1914 = vrot.slane %v1913, 2
    %v1915 = vadd.f32 %v1913, %v1914
    %v1916 = vrot.slane %v1915, 1
    %v1917 = vadd.f32 %v1915, %v1916
    %v1918 = vsel %vm47, %v1742, 0.0
    %v1919 = vrot.slane %v1918, 4
    %v1920 = vadd.f32 %v1918, %v1919
    %v1921 = vrot.slane %v1920, 2
    %v1922 = vadd.f32 %v1920, %v1921
    %v1923 = vrot.slane %v1922, 1
    %v1924 = vadd.f32 %v1922, %v1923
    %v1925 = vsel %vm47, %v1743, 0.0
    %v1926 = vrot.slane %v1925, 4
    %v1927 = vadd.f32 %v1925, %v1926
    %v1928 = vrot.slane %v1927, 2
    %v1929 = vadd.f32 %v1927, %v1928
    %v1930 = vrot.slane %v1929, 1
    %v1931 = vadd.f32 %v1929, %v1930
    %v1932 = vsel %vm47, %v1744, 0.0
    %v1933 = vrot.slane %v1932, 4
    %v1934 = vadd.f32 %v1932, %v1933
    %v1935 = vrot.slane %v1934, 2
    %v1936 = vadd.f32 %v1934, %v1935
    %v1937 = vrot.slane %v1936, 1
    %v1938 = vadd.f32 %v1936, %v1937
    %v1939 = vsel %vm47, %v1745, 0.0
    %v1940 = vrot.slane %v1939, 4
    %v1941 = vadd.f32 %v1939, %v1940
    %v1942 = vrot.slane %v1941, 2
    %v1943 = vadd.f32 %v1941, %v1942
    %v1944 = vrot.slane %v1943, 1
    %v1945 = vadd.f32 %v1943, %v1944
    %v1946 = vsel %vm47, %v1746, 0.0
    %v1947 = vrot.slane %v1946, 4
    %v1948 = vadd.f32 %v1946, %v1947
    %v1949 = vrot.slane %v1948, 2
    %v1950 = vadd.f32 %v1948, %v1949
    %v1951 = vrot.slane %v1950, 1
    %v1952 = vadd.f32 %v1950, %v1951
    %v1953 = vsel %vm47, %v1747, 0.0
    %v1954 = vrot.slane %v1953, 4
    %v1955 = vadd.f32 %v1953, %v1954
    %v1956 = vrot.slane %v1955, 2
    %v1957 = vadd.f32 %v1955, %v1956
    %v1958 = vrot.slane %v1957, 1
    %v1959 = vadd.f32 %v1957, %v1958
    %v1960 = vsel %vm47, %v1748, 0.0
    %v1961 = vrot.slane %v1960, 4
    %v1962 = vadd.f32 %v1960, %v1961
    %v1963 = vrot.slane %v1962, 2
    %v1964 = vadd.f32 %v1962, %v1963
    %v1965 = vrot.slane %v1964, 1
    %v1966 = vadd.f32 %v1964, %v1965
    %v1967 = vsel %vm47, %v1749, 0.0
    %v1968 = vrot.slane %v1967, 4
    %v1969 = vadd.f32 %v1967, %v1968
    %v1970 = vrot.slane %v1969, 2
    %v1971 = vadd.f32 %v1969, %v1970
    %v1972 = vrot.slane %v1971, 1
    %v1973 = vadd.f32 %v1971, %v1972
    %v1974 = vadd.f32 %v1685, %v1756
    %v1975 = vadd.f32 %v1686, %v1763
    %v1976 = vadd.f32 %v1687, %v1770
    %v1977 = vadd.f32 %v1688, %v1777
    %v1978 = vadd.f32 %v1689, %v1784
    %v1979 = vadd.f32 %v1690, %v1791
    %v1980 = vadd.f32 %v1691, %v1798
    %v1981 = vadd.f32 %v1692, %v1805
    %v1982 = vadd.f32 %v1693, %v1812
    %v1983 = vadd.f32 %v1694, %v1819
    %v1984 = vadd.f32 %v1695, %v1826
    %v1985 = vadd.f32 %v1696, %v1833
    %v1986 = vadd.f32 %v1697, %v1840
    %v1987 = vadd.f32 %v1698, %v1847
    %v1988 = vadd.f32 %v1699, %v1854
    %v1989 = vadd.f32 %v1700, %v1861
    %v1990 = vadd.f32 %v1701, %v1868
    %v1991 = vadd.f32 %v1702, %v1875
    %v1992 = vadd.f32 %v1703, %v1882
    %v1993 = vadd.f32 %v1704, %v1889
    %v1994 = vadd.f32 %v1705, %v1896
    %v1995 = vadd.f32 %v1706, %v1903
    %v1996 = vadd.f32 %v1707, %v1910
    %v1997 = vadd.f32 %v1708, %v1917
    %v1998 = vadd.f32 %v1709, %v1924
    %v1999 = vadd.f32 %v1710, %v1931
    %v2000 = vadd.f32 %v1711, %v1938
    %v2001 = vadd.f32 %v1712, %v1945
    %v2002 = vadd.f32 %v1713, %v1952
    %v2003 = vadd.f32 %v1714, %v1959
    %v2004 = vadd.f32 %v1715, %v1966
    %v2005 = vadd.f32 %v1716, %v1973
    %v2006 = vmul.f32 %v1974, 0.020408163
    %v2007 = vmul.f32 %v1975, 0.020408163
    %v2008 = vmul.f32 %v1976, 0.020408163
    %v2009 = vmul.f32 %v1977, 0.020408163
    %v2010 = vmul.f32 %v1978, 0.020408163
    %v2011 = vmul.f32 %v1979, 0.020408163
    %v2012 = vmul.f32 %v1980, 0.020408163
    %v2013 = vmul.f32 %v1981, 0.020408163
    %v2014 = vmul.f32 %v1982, 0.020408163
    %v2015 = vmul.f32 %v1983, 0.020408163
    %v2016 = vmul.f32 %v1984, 0.020408163
    %v2017 = vmul.f32 %v1985, 0.020408163
    %v2018 = vmul.f32 %v1986, 0.020408163
    %v2019 = vmul.f32 %v1987, 0.020408163
    %v2020 = vmul.f32 %v1988, 0.020408163
    %v2021 = vmul.f32 %v1989, 0.020408163
    %v2022 = vmul.f32 %v1990, 0.020408163
    %v2023 = vmul.f32 %v1991, 0.020408163
    %v2024 = vmul.f32 %v1992, 0.020408163
    %v2025 = vmul.f32 %v1993, 0.020408163
    %v2026 = vmul.f32 %v1994, 0.020408163
    %v2027 = vmul.f32 %v1995, 0.020408163
    %v2028 = vmul.f32 %v1996, 0.020408163
    %v2029 = vmul.f32 %v1997, 0.020408163
    %v2030 = vmul.f32 %v1998, 0.020408163
    %v2031 = vmul.f32 %v1999, 0.020408163
    %v2032 = vmul.f32 %v2000, 0.020408163
    %v2033 = vmul.f32 %v2001, 0.020408163
    %v2034 = vmul.f32 %v2002, 0.020408163
    %v2035 = vmul.f32 %v2003, 0.020408163
    %v2036 = vmul.f32 %v2004, 0.020408163
    %v2037 = vmul.f32 %v2005, 0.020408163
    %v2038 = vld [vmem:[%s1] sm:$0xff]
    %v2039 = vld [vmem:[%s1 + $0x8] sm:$0xff]
    %v2040 = vld [vmem:[%s1 + $0x10] sm:$0xff]
    %v2041 = vld [vmem:[%s1 + $0x18] sm:$0xff]
    %v2042 = vld [vmem:[%s1 + $0x20] sm:$0xff]
    %v2043 = vld [vmem:[%s1 + $0x28] sm:$0xff]
    %v2044 = vld [vmem:[%s1 + $0x30] sm:$0xff]
    %v2045 = vld [vmem:[%s1 + $0x38] sm:$0xff]
    %v2046 = vld [vmem:[%s1 + $0x40] sm:$0xff]
    %v2047 = vld [vmem:[%s1 + $0x48] sm:$0xff]
    %v2048 = vld [vmem:[%s1 + $0x50] sm:$0xff]
    %v2049 = vld [vmem:[%s1 + $0x58] sm:$0xff]
    %v2050 = vld [vmem:[%s1 + $0x60] sm:$0xff]
    %v2051 = vld [vmem:[%s1 + $0x68] sm:$0xff]
    %v2052 = vld [vmem:[%s1 + $0x70] sm:$0xff]
    %v2053 = vld [vmem:[%s1 + $0x78] sm:$0xff]
    %v2054 = vld [vmem:[%s1 + $0x80] sm:$0xff]
    %v2055 = vld [vmem:[%s1 + $0x88] sm:$0xff]
    %v2056 = vld [vmem:[%s1 + $0x90] sm:$0xff]
    %v2057 = vld [vmem:[%s1 + $0x98] sm:$0xff]
    %v2058 = vld [vmem:[%s1 + $0xa0] sm:$0xff]
    %v2059 = vld [vmem:[%s1 + $0xa8] sm:$0xff]
    %v2060 = vld [vmem:[%s1 + $0xb0] sm:$0xff]
    %v2061 = vld [vmem:[%s1 + $0xb8] sm:$0xff]
    %v2062 = vld [vmem:[%s1 + $0xc0] sm:$0xff]
    %v2063 = vld [vmem:[%s1 + $0xc8] sm:$0xff]
    %v2064 = vld [vmem:[%s1 + $0xd0] sm:$0xff]
    %v2065 = vld [vmem:[%s1 + $0xd8] sm:$0xff]
    %v2066 = vld [vmem:[%s1 + $0xe0] sm:$0xff]
    %v2067 = vld [vmem:[%s1 + $0xe8] sm:$0xff]
    %v2068 = vld [vmem:[%s1 + $0xf0] sm:$0xff]
    %v2069 = vld [vmem:[%s1 + $0xf8] sm:$0xff]
    %v2070 = vld [vmem:[%s1 + $0x100] sm:$0xff]
    %v2071 = vld [vmem:[%s1 + $0x108] sm:$0xff]
    %v2072 = vld [vmem:[%s1 + $0x110] sm:$0xff]
    %v2073 = vld [vmem:[%s1 + $0x118] sm:$0xff]
    %v2074 = vld [vmem:[%s1 + $0x120] sm:$0xff]
    %v2075 = vld [vmem:[%s1 + $0x128] sm:$0xff]
    %v2076 = vld [vmem:[%s1 + $0x130] sm:$0xff]
    %v2077 = vld [vmem:[%s1 + $0x138] sm:$0xff]
    %v2078 = vld [vmem:[%s1 + $0x140] sm:$0xff]
    %v2079 = vld [vmem:[%s1 + $0x148] sm:$0xff]
    %v2080 = vld [vmem:[%s1 + $0x150] sm:$0xff]
    %v2081 = vld [vmem:[%s1 + $0x158] sm:$0xff]
    %v2082 = vld [vmem:[%s1 + $0x160] sm:$0xff]
    %v2083 = vld [vmem:[%s1 + $0x168] sm:$0xff]
    %v2084 = vld [vmem:[%s1 + $0x170] sm:$0xff]
    %v2085 = vld [vmem:[%s1 + $0x178] sm:$0xff]
    %v2086 = vld [vmem:[%s1 + $0x180] sm:$0xff]
    %v2087 = vld [vmem:[%s1 + $0x188] sm:$0xff]
    %v2088 = vld [vmem:[%s1 + $0x190] sm:$0xff]
    %v2089 = vld [vmem:[%s1 + $0x198] sm:$0xff]
    %v2090 = vld [vmem:[%s1 + $0x1a0] sm:$0xff]
    %v2091 = vld [vmem:[%s1 + $0x1a8] sm:$0xff]
    %v2092 = vld [vmem:[%s1 + $0x1b0] sm:$0xff]
    %v2093 = vld [vmem:[%s1 + $0x1b8] sm:$0xff]
    %v2094 = vld [vmem:[%s1 + $0x1c0] sm:$0xff]
    %v2095 = vld [vmem:[%s1 + $0x1c8] sm:$0xff]
    %v2096 = vld [vmem:[%s1 + $0x1d0] sm:$0xff]
    %v2097 = vld [vmem:[%s1 + $0x1d8] sm:$0xff]
    %v2098 = vld [vmem:[%s1 + $0x1e0] sm:$0xff]
    %v2099 = vld [vmem:[%s1 + $0x1e8] sm:$0xff]
    %v2100 = vld [vmem:[%s1 + $0x1f0] sm:$0xff]
    %v2101 = vld [vmem:[%s1 + $0x1f8] sm:$0xff]
    %v2102 = vld [vmem:[%s1 + $0x200] sm:$0xff]
    %v2103 = vld [vmem:[%s1 + $0x208] sm:$0xff]
    %v2104 = vld [vmem:[%s1 + $0x210] sm:$0xff]
    %v2105 = vld [vmem:[%s1 + $0x218] sm:$0xff]
    %v2106 = vld [vmem:[%s1 + $0x220] sm:$0xff]
    %v2107 = vld [vmem:[%s1 + $0x228] sm:$0xff]
    %v2108 = vld [vmem:[%s1 + $0x230] sm:$0xff]
    %v2109 = vld [vmem:[%s1 + $0x238] sm:$0xff]
    %v2110 = vld [vmem:[%s1 + $0x240] sm:$0xff]
    %v2111 = vld [vmem:[%s1 + $0x248] sm:$0xff]
    %v2112 = vld [vmem:[%s1 + $0x250] sm:$0xff]
    %v2113 = vld [vmem:[%s1 + $0x258] sm:$0xff]
    %v2114 = vld [vmem:[%s1 + $0x260] sm:$0xff]
    %v2115 = vld [vmem:[%s1 + $0x268] sm:$0xff]
    %v2116 = vld [vmem:[%s1 + $0x270] sm:$0xff]
    %v2117 = vld [vmem:[%s1 + $0x278] sm:$0xff]
    %v2118 = vld [vmem:[%s1 + $0x280] sm:$0xff]
    %v2119 = vld [vmem:[%s1 + $0x288] sm:$0xff]
    %v2120 = vld [vmem:[%s1 + $0x290] sm:$0xff]
    %v2121 = vld [vmem:[%s1 + $0x298] sm:$0xff]
    %v2122 = vld [vmem:[%s1 + $0x2a0] sm:$0xff]
    %v2123 = vld [vmem:[%s1 + $0x2a8] sm:$0xff]
    %v2124 = vld [vmem:[%s1 + $0x2b0] sm:$0xff]
    %v2125 = vld [vmem:[%s1 + $0x2b8] sm:$0xff]
    %v2126 = vld [vmem:[%s1 + $0x2c0] sm:$0xff]
    %v2127 = vld [vmem:[%s1 + $0x2c8] sm:$0xff]
    %v2128 = vld [vmem:[%s1 + $0x2d0] sm:$0xff]
    %v2129 = vld [vmem:[%s1 + $0x2d8] sm:$0xff]
    %v2130 = vld [vmem:[%s1 + $0x2e0] sm:$0xff]
    %v2131 = vld [vmem:[%s1 + $0x2e8] sm:$0xff]
    %v2132 = vld [vmem:[%s1 + $0x2f0] sm:$0xff]
    %v2133 = vld [vmem:[%s1 + $0x2f8] sm:$0xff]
    %v2134 = vld [vmem:[%s1 + $0x300] sm:$0xff]
    %v2135 = vld [vmem:[%s1 + $0x308] sm:$0xff]
    %v2136 = vld [vmem:[%s1 + $0x310] sm:$0xff]
    %v2137 = vld [vmem:[%s1 + $0x318] sm:$0xff]
    %v2138 = vld [vmem:[%s1 + $0x320] sm:$0xff]
    %v2139 = vld [vmem:[%s1 + $0x328] sm:$0xff]
    %v2140 = vld [vmem:[%s1 + $0x330] sm:$0xff]
    %v2141 = vld [vmem:[%s1 + $0x338] sm:$0xff]
    %v2142 = vld [vmem:[%s1 + $0x340] sm:$0xff]
    %v2143 = vld [vmem:[%s1 + $0x348] sm:$0xff]
    %v2144 = vld [vmem:[%s1 + $0x350] sm:$0xff]
    %v2145 = vld [vmem:[%s1 + $0x358] sm:$0xff]
    %v2146 = vld [vmem:[%s1 + $0x360] sm:$0xff]
    %v2147 = vld [vmem:[%s1 + $0x368] sm:$0xff]
    %v2148 = vld [vmem:[%s1 + $0x370] sm:$0xff]
    %v2149 = vld [vmem:[%s1 + $0x378] sm:$0xff]
    %v2150 = vld [vmem:[%s1 + $0x380] sm:$0xff]
    %v2151 = vld [vmem:[%s1 + $0x388] sm:$0xff]
    %v2152 = vld [vmem:[%s1 + $0x390] sm:$0xff]
    %v2153 = vld [vmem:[%s1 + $0x398] sm:$0xff]
    %v2154 = vld [vmem:[%s1 + $0x3a0] sm:$0xff]
    %v2155 = vld [vmem:[%s1 + $0x3a8] sm:$0xff]
    %v2156 = vld [vmem:[%s1 + $0x3b0] sm:$0xff]
    %v2157 = vld [vmem:[%s1 + $0x3b8] sm:$0xff]
    %v2158 = vld [vmem:[%s1 + $0x3c0] sm:$0xff]
    %v2159 = vld [vmem:[%s1 + $0x3c8] sm:$0xff]
    %v2160 = vld [vmem:[%s1 + $0x3d0] sm:$0xff]
    %v2161 = vld [vmem:[%s1 + $0x3d8] sm:$0xff]
    %v2162 = vld [vmem:[%s1 + $0x3e0] sm:$0xff]
    %v2163 = vld [vmem:[%s1 + $0x3e8] sm:$0xff]
    %v2164 = vld [vmem:[%s1 + $0x3f0] sm:$0xff]
    %v2165 = vld [vmem:[%s1 + $0x3f8] sm:$0xff]
    %v2166 = vld [vmem:[%s1 + $0x400] sm:$0xff]
    %v2167 = vld [vmem:[%s1 + $0x408] sm:$0xff]
    %v2168 = vld [vmem:[%s1 + $0x410] sm:$0xff]
    %v2169 = vld [vmem:[%s1 + $0x418] sm:$0xff]
    %v2170 = vld [vmem:[%s1 + $0x420] sm:$0xff]
    %v2171 = vld [vmem:[%s1 + $0x428] sm:$0xff]
    %v2172 = vld [vmem:[%s1 + $0x430] sm:$0xff]
    %v2173 = vld [vmem:[%s1 + $0x438] sm:$0xff]
    %v2174 = vld [vmem:[%s1 + $0x440] sm:$0xff]
    %v2175 = vld [vmem:[%s1 + $0x448] sm:$0xff]
    %v2176 = vld [vmem:[%s1 + $0x450] sm:$0xff]
    %v2177 = vld [vmem:[%s1 + $0x458] sm:$0xff]
    %v2178 = vld [vmem:[%s1 + $0x460] sm:$0xff]
    %v2179 = vld [vmem:[%s1 + $0x468] sm:$0xff]
    %v2180 = vld [vmem:[%s1 + $0x470] sm:$0xff]
    %v2181 = vld [vmem:[%s1 + $0x478] sm:$0xff]
    %v2182 = vld [vmem:[%s1 + $0x480] sm:$0xff]
    %v2183 = vld [vmem:[%s1 + $0x488] sm:$0xff]
    %v2184 = vld [vmem:[%s1 + $0x490] sm:$0xff]
    %v2185 = vld [vmem:[%s1 + $0x498] sm:$0xff]
    %v2186 = vld [vmem:[%s1 + $0x4a0] sm:$0xff]
    %v2187 = vld [vmem:[%s1 + $0x4a8] sm:$0xff]
    %v2188 = vld [vmem:[%s1 + $0x4b0] sm:$0xff]
    %v2189 = vld [vmem:[%s1 + $0x4b8] sm:$0xff]
    %v2190 = vld [vmem:[%s1 + $0x4c0] sm:$0xff]
    %v2191 = vld [vmem:[%s1 + $0x4c8] sm:$0xff]
    %v2192 = vld [vmem:[%s1 + $0x4d0] sm:$0xff]
    %v2193 = vld [vmem:[%s1 + $0x4d8] sm:$0xff]
    %v2194 = vld [vmem:[%s1 + $0x4e0] sm:$0xff]
    %v2195 = vld [vmem:[%s1 + $0x4e8] sm:$0xff]
    %v2196 = vld [vmem:[%s1 + $0x4f0] sm:$0xff]
    %v2197 = vld [vmem:[%s1 + $0x4f8] sm:$0xff]
    %v2198 = vld [vmem:[%s1 + $0x500] sm:$0xff]
    %v2199 = vld [vmem:[%s1 + $0x508] sm:$0xff]
    %v2200 = vld [vmem:[%s1 + $0x510] sm:$0xff]
    %v2201 = vld [vmem:[%s1 + $0x518] sm:$0xff]
    %v2202 = vld [vmem:[%s1 + $0x520] sm:$0xff]
    %v2203 = vld [vmem:[%s1 + $0x528] sm:$0xff]
    %v2204 = vld [vmem:[%s1 + $0x530] sm:$0xff]
    %v2205 = vld [vmem:[%s1 + $0x538] sm:$0xff]
    %v2206 = vld [vmem:[%s1 + $0x540] sm:$0xff]
    %v2207 = vld [vmem:[%s1 + $0x548] sm:$0xff]
    %v2208 = vld [vmem:[%s1 + $0x550] sm:$0xff]
    %v2209 = vld [vmem:[%s1 + $0x558] sm:$0xff]
    %v2210 = vld [vmem:[%s1 + $0x560] sm:$0xff]
    %v2211 = vld [vmem:[%s1 + $0x568] sm:$0xff]
    %v2212 = vld [vmem:[%s1 + $0x570] sm:$0xff]
    %v2213 = vld [vmem:[%s1 + $0x578] sm:$0xff]
    %v2214 = vld [vmem:[%s1 + $0x580] sm:$0xff]
    %v2215 = vld [vmem:[%s1 + $0x588] sm:$0xff]
    %v2216 = vld [vmem:[%s1 + $0x590] sm:$0xff]
    %v2217 = vld [vmem:[%s1 + $0x598] sm:$0xff]
    %v2218 = vld [vmem:[%s1 + $0x5a0] sm:$0xff]
    %v2219 = vld [vmem:[%s1 + $0x5a8] sm:$0xff]
    %v2220 = vld [vmem:[%s1 + $0x5b0] sm:$0xff]
    %v2221 = vld [vmem:[%s1 + $0x5b8] sm:$0xff]
    %v2222 = vld [vmem:[%s1 + $0x5c0] sm:$0xff]
    %v2223 = vld [vmem:[%s1 + $0x5c8] sm:$0xff]
    %v2224 = vld [vmem:[%s1 + $0x5d0] sm:$0xff]
    %v2225 = vld [vmem:[%s1 + $0x5d8] sm:$0xff]
    %v2226 = vld [vmem:[%s1 + $0x5e0] sm:$0xff]
    %v2227 = vld [vmem:[%s1 + $0x5e8] sm:$0xff]
    %v2228 = vld [vmem:[%s1 + $0x5f0] sm:$0xff]
    %v2229 = vld [vmem:[%s1 + $0x5f8] sm:$0xff]
    %v2230 = vld [vmem:[%s1 + $0x600] sm:$0xff]
    %v2231 = vld [vmem:[%s1 + $0x608] sm:$0xff]
    %v2232 = vld [vmem:[%s1 + $0x610] sm:$0xff]
    %v2233 = vld [vmem:[%s1 + $0x618] sm:$0xff]
    %v2234 = vld [vmem:[%s1 + $0x620] sm:$0xff]
    %v2235 = vld [vmem:[%s1 + $0x628] sm:$0xff]
    %v2236 = vld [vmem:[%s1 + $0x630] sm:$0xff]
    %v2237 = vld [vmem:[%s1 + $0x638] sm:$0xff]
    %v2238 = vld [vmem:[%s1 + $0x640] sm:$0xff]
    %v2239 = vld [vmem:[%s1 + $0x648] sm:$0xff]
    %v2240 = vld [vmem:[%s1 + $0x650] sm:$0xff]
    %v2241 = vld [vmem:[%s1 + $0x658] sm:$0xff]
    %v2242 = vld [vmem:[%s1 + $0x660] sm:$0xff]
    %v2243 = vld [vmem:[%s1 + $0x668] sm:$0xff]
    %v2244 = vld [vmem:[%s1 + $0x670] sm:$0xff]
    %v2245 = vld [vmem:[%s1 + $0x678] sm:$0xff]
    %v2246 = vld [vmem:[%s1 + $0x680] sm:$0xff]
    %v2247 = vld [vmem:[%s1 + $0x688] sm:$0xff]
    %v2248 = vld [vmem:[%s1 + $0x690] sm:$0xff]
    %v2249 = vld [vmem:[%s1 + $0x698] sm:$0xff]
    %v2250 = vld [vmem:[%s1 + $0x6a0] sm:$0xff]
    %v2251 = vld [vmem:[%s1 + $0x6a8] sm:$0xff]
    %v2252 = vld [vmem:[%s1 + $0x6b0] sm:$0xff]
    %v2253 = vld [vmem:[%s1 + $0x6b8] sm:$0xff]
    %v2254 = vld [vmem:[%s1 + $0x6c0] sm:$0xff]
    %v2255 = vld [vmem:[%s1 + $0x6c8] sm:$0xff]
    %v2256 = vld [vmem:[%s1 + $0x6d0] sm:$0xff]
    %v2257 = vld [vmem:[%s1 + $0x6d8] sm:$0xff]
    %v2258 = vld [vmem:[%s1 + $0x6e0] sm:$0xff]
    %v2259 = vld [vmem:[%s1 + $0x6e8] sm:$0xff]
    %v2260 = vld [vmem:[%s1 + $0x6f0] sm:$0xff]
    %v2261 = vld [vmem:[%s1 + $0x6f8] sm:$0xff]
    %v2262 = vld [vmem:[%s1 + $0x700] sm:$0xff]
    %v2263 = vld [vmem:[%s1 + $0x708] sm:$0xff]
    %v2264 = vld [vmem:[%s1 + $0x710] sm:$0xff]
    %v2265 = vld [vmem:[%s1 + $0x718] sm:$0xff]
    %v2266 = vld [vmem:[%s1 + $0x720] sm:$0xff]
    %v2267 = vld [vmem:[%s1 + $0x728] sm:$0xff]
    %v2268 = vld [vmem:[%s1 + $0x730] sm:$0xff]
    %v2269 = vld [vmem:[%s1 + $0x738] sm:$0xff]
    %v2270 = vld [vmem:[%s1 + $0x740] sm:$0xff]
    %v2271 = vld [vmem:[%s1 + $0x748] sm:$0xff]
    %v2272 = vld [vmem:[%s1 + $0x750] sm:$0xff]
    %v2273 = vld [vmem:[%s1 + $0x758] sm:$0xff]
    %v2274 = vld [vmem:[%s1 + $0x760] sm:$0xff]
    %v2275 = vld [vmem:[%s1 + $0x768] sm:$0xff]
    %v2276 = vld [vmem:[%s1 + $0x770] sm:$0xff]
    %v2277 = vld [vmem:[%s1 + $0x778] sm:$0xff]
    %v2278 = vld [vmem:[%s1 + $0x780] sm:$0xff]
    %v2279 = vld [vmem:[%s1 + $0x788] sm:$0xff]
    %v2280 = vld [vmem:[%s1 + $0x790] sm:$0xff]
    %v2281 = vld [vmem:[%s1 + $0x798] sm:$0xff]
    %v2282 = vld [vmem:[%s1 + $0x7a0] sm:$0xff]
    %v2283 = vld [vmem:[%s1 + $0x7a8] sm:$0xff]
    %v2284 = vld [vmem:[%s1 + $0x7b0] sm:$0xff]
    %v2285 = vld [vmem:[%s1 + $0x7b8] sm:$0xff]
    %v2286 = vld [vmem:[%s1 + $0x7c0] sm:$0xff]
    %v2287 = vld [vmem:[%s1 + $0x7c8] sm:$0xff]
    %v2288 = vld [vmem:[%s1 + $0x7d0] sm:$0xff]
    %v2289 = vld [vmem:[%s1 + $0x7d8] sm:$0xff]
    %v2290 = vld [vmem:[%s1 + $0x7e0] sm:$0xff]
    %v2291 = vld [vmem:[%s1 + $0x7e8] sm:$0xff]
    %v2292 = vld [vmem:[%s1 + $0x7f0] sm:$0xff]
    %v2293 = vld [vmem:[%s1 + $0x7f8] sm:$0xff]
    %v2294 = vld [vmem:[%s2] sm:$0x1]
    %v2296 = vlaneseq
    %v2297 = vshrl.u32 %v2296, 7
    %v2298 = vsub.s32 0, %v2297
    %v2299 = vrot.slane %v2294, %v2298
    %vm2333 = vcmask 1041409
    %v2334 = vsel %vm2333, %v2022, %v2006
    %v2335 = vsel %vm2333, %v2023, %v2007
    %v2336 = vsel %vm2333, %v2024, %v2008
    %v2337 = vsel %vm2333, %v2025, %v2009
    %v2338 = vsel %vm2333, %v2026, %v2010
    %v2339 = vsel %vm2333, %v2027, %v2011
    %v2340 = vsel %vm2333, %v2028, %v2012
    %v2341 = vsel %vm2333, %v2029, %v2013
    %v2342 = vsel %vm2333, %v2030, %v2014
    %v2343 = vsel %vm2333, %v2031, %v2015
    %v2344 = vsel %vm2333, %v2032, %v2016
    %v2345 = vsel %vm2333, %v2033, %v2017
    %v2346 = vsel %vm2333, %v2034, %v2018
    %v2347 = vsel %vm2333, %v2035, %v2019
    %v2348 = vsel %vm2333, %v2036, %v2020
    %v2349 = vsel %vm2333, %v2037, %v2021
    %2366 = vmatprep.subr.mxu0 0.0
    %2367 = vmatpush1.msra.mxu0 %v2053
    %2368 = vmatprep.subr.mxu0 0.0
    %2369 = vmatpush1.msra.mxu0 %v2052
    %2370 = vmatprep.subr.mxu0 0.0
    %2371 = vmatpush1.msra.mxu0 %v2051
    %2372 = vmatprep.subr.mxu0 0.0
    %2373 = vmatpush1.msra.mxu0 %v2050
    %2374 = vmatprep.subr.mxu0 0.0
    %2375 = vmatpush1.msra.mxu0 %v2049
    %2376 = vmatprep.subr.mxu0 0.0
    %2377 = vmatpush1.msra.mxu0 %v2048
    %2378 = vmatprep.subr.mxu0 0.0
    %2379 = vmatpush1.msra.mxu0 %v2047
    %2380 = vmatprep.subr.mxu0 0.0
    %2381 = vmatpush1.msra.mxu0 %v2046
    %2382 = vmatprep.subr.mxu0 0.0
    %2383 = vmatpush1.msra.mxu0 %v2045
    %2384 = vmatprep.subr.mxu0 0.0
    %2385 = vmatpush1.msra.mxu0 %v2044
    %2386 = vmatprep.subr.mxu0 0.0
    %2387 = vmatpush1.msra.mxu0 %v2043
    %2388 = vmatprep.subr.mxu0 0.0
    %2389 = vmatpush1.msra.mxu0 %v2042
    %2390 = vmatprep.subr.mxu0 0.0
    %2391 = vmatpush1.msra.mxu0 %v2041
    %2392 = vmatprep.subr.mxu0 0.0
    %2393 = vmatpush1.msra.mxu0 %v2040
    %2394 = vmatprep.subr.mxu0 0.0
    %2395 = vmatpush1.msra.mxu0 %v2039
    %2396 = vmatprep.subr.mxu0 0.0
    %2397 = vmatpush1.msra.mxu0 %v2038
    %2398 = vmatprep.subr.mxu0 0.0
    %2399 = vmatpush2.msra.mxu0 %v2069
    %2400 = vmatprep.subr.mxu0 0.0
    %2401 = vmatpush2.msra.mxu0 %v2068
    %2402 = vmatprep.subr.mxu0 0.0
    %2403 = vmatpush2.msra.mxu0 %v2067
    %2404 = vmatprep.subr.mxu0 0.0
    %2405 = vmatpush2.msra.mxu0 %v2066
    %2406 = vmatprep.subr.mxu0 0.0
    %2407 = vmatpush2.msra.mxu0 %v2065
    %2408 = vmatprep.subr.mxu0 0.0
    %2409 = vmatpush2.msra.mxu0 %v2064
    %2410 = vmatprep.subr.mxu0 0.0
    %2411 = vmatpush2.msra.mxu0 %v2063
    %2412 = vmatprep.subr.mxu0 0.0
    %2413 = vmatpush2.msra.mxu0 %v2062
    %2414 = vmatprep.subr.mxu0 0.0
    %2415 = vmatpush2.msra.mxu0 %v2061
    %2416 = vmatprep.subr.mxu0 0.0
    %2417 = vmatpush2.msra.mxu0 %v2060
    %2418 = vmatprep.subr.mxu0 0.0
    %2419 = vmatpush2.msra.mxu0 %v2059
    %2420 = vmatprep.subr.mxu0 0.0
    %2421 = vmatpush2.msra.mxu0 %v2058
    %2422 = vmatprep.subr.mxu0 0.0
    %2423 = vmatpush2.msra.mxu0 %v2057
    %2424 = vmatprep.subr.mxu0 0.0
    %2425 = vmatpush2.msra.mxu0 %v2056
    %2426 = vmatprep.subr.mxu0 0.0
    %2427 = vmatpush2.msra.mxu0 %v2055
    %2428 = vmatprep.subr.mxu0 0.0
    %2429 = vmatpush2.msra.mxu0 %v2054
    %2430 = vmatprep.mubr.f32.mxu0 %v2335
    %2431 = vmatmul.mubr.f32.gmra.mxu0 %v2334
    %v2432 = vpop.f32.mrf.mxu0
    %v2433 = vadd.f32 %v2299, %v2432
    %v2434 = vpop.f32.mrf.mxu0
    %2435 = vdwg.mxu0
    %2436 = vmatprep.subr.mxu0 0.0
    %2437 = vmatpush1.msra.mxu0 %v2085
    %2438 = vmatprep.subr.mxu0 0.0
    %2439 = vmatpush1.msra.mxu0 %v2084
    %2440 = vmatprep.subr.mxu0 0.0
    %2441 = vmatpush1.msra.mxu0 %v2083
    %2442 = vmatprep.subr.mxu0 0.0
    %2443 = vmatpush1.msra.mxu0 %v2082
    %2444 = vmatprep.subr.mxu0 0.0
    %2445 = vmatpush1.msra.mxu0 %v2081
    %2446 = vmatprep.subr.mxu0 0.0
    %2447 = vmatpush1.msra.mxu0 %v2080
    %2448 = vmatprep.subr.mxu0 0.0
    %2449 = vmatpush1.msra.mxu0 %v2079
    %2450 = vmatprep.subr.mxu0 0.0
    %2451 = vmatpush1.msra.mxu0 %v2078
    %2452 = vmatprep.subr.mxu0 0.0
    %2453 = vmatpush1.msra.mxu0 %v2077
    %2454 = vmatprep.subr.mxu0 0.0
    %2455 = vmatpush1.msra.mxu0 %v2076
    %2456 = vmatprep.subr.mxu0 0.0
    %2457 = vmatpush1.msra.mxu0 %v2075
    %2458 = vmatprep.subr.mxu0 0.0
    %2459 = vmatpush1.msra.mxu0 %v2074
    %2460 = vmatprep.subr.mxu0 0.0
    %2461 = vmatpush1.msra.mxu0 %v2073
    %2462 = vmatprep.subr.mxu0 0.0
    %2463 = vmatpush1.msra.mxu0 %v2072
    %2464 = vmatprep.subr.mxu0 0.0
    %2465 = vmatpush1.msra.mxu0 %v2071
    %2466 = vmatprep.subr.mxu0 0.0
    %2467 = vmatpush1.msra.mxu0 %v2070
    %2468 = vmatprep.subr.mxu0 0.0
    %2469 = vmatpush2.msra.mxu0 %v2101
    %2470 = vmatprep.subr.mxu0 0.0
    %2471 = vmatpush2.msra.mxu0 %v2100
    %2472 = vmatprep.subr.mxu0 0.0
    %2473 = vmatpush2.msra.mxu0 %v2099
    %2474 = vmatprep.subr.mxu0 0.0
    %2475 = vmatpush2.msra.mxu0 %v2098
    %2476 = vmatprep.subr.mxu0 0.0
    %2477 = vmatpush2.msra.mxu0 %v2097
    %2478 = vmatprep.subr.mxu0 0.0
    %2479 = vmatpush2.msra.mxu0 %v2096
    %2480 = vmatprep.subr.mxu0 0.0
    %2481 = vmatpush2.msra.mxu0 %v2095
    %2482 = vmatprep.subr.mxu0 0.0
    %2483 = vmatpush2.msra.mxu0 %v2094
    %2484 = vmatprep.subr.mxu0 0.0
    %2485 = vmatpush2.msra.mxu0 %v2093
    %2486 = vmatprep.subr.mxu0 0.0
    %2487 = vmatpush2.msra.mxu0 %v2092
    %2488 = vmatprep.subr.mxu0 0.0
    %2489 = vmatpush2.msra.mxu0 %v2091
    %2490 = vmatprep.subr.mxu0 0.0
    %2491 = vmatpush2.msra.mxu0 %v2090
    %2492 = vmatprep.subr.mxu0 0.0
    %2493 = vmatpush2.msra.mxu0 %v2089
    %2494 = vmatprep.subr.mxu0 0.0
    %2495 = vmatpush2.msra.mxu0 %v2088
    %2496 = vmatprep.subr.mxu0 0.0
    %2497 = vmatpush2.msra.mxu0 %v2087
    %2498 = vmatprep.subr.mxu0 0.0
    %2499 = vmatpush2.msra.mxu0 %v2086
    %2500 = vmatprep.mubr.f32.mxu0 %v2337
    %2501 = vmatmul.mubr.f32.gmra.mxu0 %v2336
    %v2502 = vpop.f32.mrf.mxu0
    %v2503 = vadd.f32 %v2433, %v2502
    %v2504 = vpop.f32.mrf.mxu0
    %2505 = vdwg.mxu0
    %2506 = vmatprep.subr.mxu0 0.0
    %2507 = vmatpush1.msra.mxu0 %v2117
    %2508 = vmatprep.subr.mxu0 0.0
    %2509 = vmatpush1.msra.mxu0 %v2116
    %2510 = vmatprep.subr.mxu0 0.0
    %2511 = vmatpush1.msra.mxu0 %v2115
    %2512 = vmatprep.subr.mxu0 0.0
    %2513 = vmatpush1.msra.mxu0 %v2114
    %2514 = vmatprep.subr.mxu0 0.0
    %2515 = vmatpush1.msra.mxu0 %v2113
    %2516 = vmatprep.subr.mxu0 0.0
    %2517 = vmatpush1.msra.mxu0 %v2112
    %2518 = vmatprep.subr.mxu0 0.0
    %2519 = vmatpush1.msra.mxu0 %v2111
    %2520 = vmatprep.subr.mxu0 0.0
    %2521 = vmatpush1.msra.mxu0 %v2110
    %2522 = vmatprep.subr.mxu0 0.0
    %2523 = vmatpush1.msra.mxu0 %v2109
    %2524 = vmatprep.subr.mxu0 0.0
    %2525 = vmatpush1.msra.mxu0 %v2108
    %2526 = vmatprep.subr.mxu0 0.0
    %2527 = vmatpush1.msra.mxu0 %v2107
    %2528 = vmatprep.subr.mxu0 0.0
    %2529 = vmatpush1.msra.mxu0 %v2106
    %2530 = vmatprep.subr.mxu0 0.0
    %2531 = vmatpush1.msra.mxu0 %v2105
    %2532 = vmatprep.subr.mxu0 0.0
    %2533 = vmatpush1.msra.mxu0 %v2104
    %2534 = vmatprep.subr.mxu0 0.0
    %2535 = vmatpush1.msra.mxu0 %v2103
    %2536 = vmatprep.subr.mxu0 0.0
    %2537 = vmatpush1.msra.mxu0 %v2102
    %2538 = vmatprep.subr.mxu0 0.0
    %2539 = vmatpush2.msra.mxu0 %v2133
    %2540 = vmatprep.subr.mxu0 0.0
    %2541 = vmatpush2.msra.mxu0 %v2132
    %2542 = vmatprep.subr.mxu0 0.0
    %2543 = vmatpush2.msra.mxu0 %v2131
    %2544 = vmatprep.subr.mxu0 0.0
    %2545 = vmatpush2.msra.mxu0 %v2130
    %2546 = vmatprep.subr.mxu0 0.0
    %2547 = vmatpush2.msra.mxu0 %v2129
    %2548 = vmatprep.subr.mxu0 0.0
    %2549 = vmatpush2.msra.mxu0 %v2128
    %2550 = vmatprep.subr.mxu0 0.0
    %2551 = vmatpush2.msra.mxu0 %v2127
    %2552 = vmatprep.subr.mxu0 0.0
    %2553 = vmatpush2.msra.mxu0 %v2126
    %2554 = vmatprep.subr.mxu0 0.0
    %2555 = vmatpush2.msra.mxu0 %v2125
    %2556 = vmatprep.subr.mxu0 0.0
    %2557 = vmatpush2.msra.mxu0 %v2124
    %2558 = vmatprep.subr.mxu0 0.0
    %2559 = vmatpush2.msra.mxu0 %v2123
    %2560 = vmatprep.subr.mxu0 0.0
    %2561 = vmatpush2.msra.mxu0 %v2122
    %2562 = vmatprep.subr.mxu0 0.0
    %2563 = vmatpush2.msra.mxu0 %v2121
    %2564 = vmatprep.subr.mxu0 0.0
    %2565 = vmatpush2.msra.mxu0 %v2120
    %2566 = vmatprep.subr.mxu0 0.0
    %2567 = vmatpush2.msra.mxu0 %v2119
    %2568 = vmatprep.subr.mxu0 0.0
    %2569 = vmatpush2.msra.mxu0 %v2118
    %2570 = vmatprep.mubr.f32.mxu0 %v2339
    %2571 = vmatmul.mubr.f32.gmra.mxu0 %v2338
    %v2572 = vpop.f32.mrf.mxu0
    %v2573 = vadd.f32 %v2503, %v2572
    %v2574 = vpop.f32.mrf.mxu0
    %2575 = vdwg.mxu0
    %2576 = vmatprep.subr.mxu0 0.0
    %2577 = vmatpush1.msra.mxu0 %v2149
    %2578 = vmatprep.subr.mxu0 0.0
    %2579 = vmatpush1.msra.mxu0 %v2148
    %2580 = vmatprep.subr.mxu0 0.0
    %2581 = vmatpush1.msra.mxu0 %v2147
    %2582 = vmatprep.subr.mxu0 0.0
    %2583 = vmatpush1.msra.mxu0 %v2146
    %2584 = vmatprep.subr.mxu0 0.0
    %2585 = vmatpush1.msra.mxu0 %v2145
    %2586 = vmatprep.subr.mxu0 0.0
    %2587 = vmatpush1.msra.mxu0 %v2144
    %2588 = vmatprep.subr.mxu0 0.0
    %2589 = vmatpush1.msra.mxu0 %v2143
    %2590 = vmatprep.subr.mxu0 0.0
    %2591 = vmatpush1.msra.mxu0 %v2142
    %2592 = vmatprep.subr.mxu0 0.0
    %2593 = vmatpush1.msra.mxu0 %v2141
    %2594 = vmatprep.subr.mxu0 0.0
    %2595 = vmatpush1.msra.mxu0 %v2140
    %2596 = vmatprep.subr.mxu0 0.0
    %2597 = vmatpush1.msra.mxu0 %v2139
    %2598 = vmatprep.subr.mxu0 0.0
    %2599 = vmatpush1.msra.mxu0 %v2138
    %2600 = vmatprep.subr.mxu0 0.0
    %2601 = vmatpush1.msra.mxu0 %v2137
    %2602 = vmatprep.subr.mxu0 0.0
    %2603 = vmatpush1.msra.mxu0 %v2136
    %2604 = vmatprep.subr.mxu0 0.0
    %2605 = vmatpush1.msra.mxu0 %v2135
    %2606 = vmatprep.subr.mxu0 0.0
    %2607 = vmatpush1.msra.mxu0 %v2134
    %2608 = vmatprep.subr.mxu0 0.0
    %2609 = vmatpush2.msra.mxu0 %v2165
    %2610 = vmatprep.subr.mxu0 0.0
    %2611 = vmatpush2.msra.mxu0 %v2164
    %2612 = vmatprep.subr.mxu0 0.0
    %2613 = vmatpush2.msra.mxu0 %v2163
    %2614 = vmatprep.subr.mxu0 0.0
    %2615 = vmatpush2.msra.mxu0 %v2162
    %2616 = vmatprep.subr.mxu0 0.0
    %2617 = vmatpush2.msra.mxu0 %v2161
    %2618 = vmatprep.subr.mxu0 0.0
    %2619 = vmatpush2.msra.mxu0 %v2160
    %2620 = vmatprep.subr.mxu0 0.0
    %2621 = vmatpush2.msra.mxu0 %v2159
    %2622 = vmatprep.subr.mxu0 0.0
    %2623 = vmatpush2.msra.mxu0 %v2158
    %2624 = vmatprep.subr.mxu0 0.0
    %2625 = vmatpush2.msra.mxu0 %v2157
    %2626 = vmatprep.subr.mxu0 0.0
    %2627 = vmatpush2.msra.mxu0 %v2156
    %2628 = vmatprep.subr.mxu0 0.0
    %2629 = vmatpush2.msra.mxu0 %v2155
    %2630 = vmatprep.subr.mxu0 0.0
    %2631 = vmatpush2.msra.mxu0 %v2154
    %2632 = vmatprep.subr.mxu0 0.0
    %2633 = vmatpush2.msra.mxu0 %v2153
    %2634 = vmatprep.subr.mxu0 0.0
    %2635 = vmatpush2.msra.mxu0 %v2152
    %2636 = vmatprep.subr.mxu0 0.0
    %2637 = vmatpush2.msra.mxu0 %v2151
    %2638 = vmatprep.subr.mxu0 0.0
    %2639 = vmatpush2.msra.mxu0 %v2150
    %2640 = vmatprep.mubr.f32.mxu0 %v2341
    %2641 = vmatmul.mubr.f32.gmra.mxu0 %v2340
    %v2642 = vpop.f32.mrf.mxu0
    %v2643 = vadd.f32 %v2573, %v2642
    %v2644 = vpop.f32.mrf.mxu0
    %2645 = vdwg.mxu0
    %2646 = vmatprep.subr.mxu0 0.0
    %2647 = vmatpush1.msra.mxu0 %v2181
    %2648 = vmatprep.subr.mxu0 0.0
    %2649 = vmatpush1.msra.mxu0 %v2180
    %2650 = vmatprep.subr.mxu0 0.0
    %2651 = vmatpush1.msra.mxu0 %v2179
    %2652 = vmatprep.subr.mxu0 0.0
    %2653 = vmatpush1.msra.mxu0 %v2178
    %2654 = vmatprep.subr.mxu0 0.0
    %2655 = vmatpush1.msra.mxu0 %v2177
    %2656 = vmatprep.subr.mxu0 0.0
    %2657 = vmatpush1.msra.mxu0 %v2176
    %2658 = vmatprep.subr.mxu0 0.0
    %2659 = vmatpush1.msra.mxu0 %v2175
    %2660 = vmatprep.subr.mxu0 0.0
    %2661 = vmatpush1.msra.mxu0 %v2174
    %2662 = vmatprep.subr.mxu0 0.0
    %2663 = vmatpush1.msra.mxu0 %v2173
    %2664 = vmatprep.subr.mxu0 0.0
    %2665 = vmatpush1.msra.mxu0 %v2172
    %2666 = vmatprep.subr.mxu0 0.0
    %2667 = vmatpush1.msra.mxu0 %v2171
    %2668 = vmatprep.subr.mxu0 0.0
    %2669 = vmatpush1.msra.mxu0 %v2170
    %2670 = vmatprep.subr.mxu0 0.0
    %2671 = vmatpush1.msra.mxu0 %v2169
    %2672 = vmatprep.subr.mxu0 0.0
    %2673 = vmatpush1.msra.mxu0 %v2168
    %2674 = vmatprep.subr.mxu0 0.0
    %2675 = vmatpush1.msra.mxu0 %v2167
    %2676 = vmatprep.subr.mxu0 0.0
    %2677 = vmatpush1.msra.mxu0 %v2166
    %2678 = vmatprep.subr.mxu0 0.0
    %2679 = vmatpush2.msra.mxu0 %v2197
    %2680 = vmatprep.subr.mxu0 0.0
    %2681 = vmatpush2.msra.mxu0 %v2196
    %2682 = vmatprep.subr.mxu0 0.0
    %2683 = vmatpush2.msra.mxu0 %v2195
    %2684 = vmatprep.subr.mxu0 0.0
    %2685 = vmatpush2.msra.mxu0 %v2194
    %2686 = vmatprep.subr.mxu0 0.0
    %2687 = vmatpush2.msra.mxu0 %v2193
    %2688 = vmatprep.subr.mxu0 0.0
    %2689 = vmatpush2.msra.mxu0 %v2192
    %2690 = vmatprep.subr.mxu0 0.0
    %2691 = vmatpush2.msra.mxu0 %v2191
    %2692 = vmatprep.subr.mxu0 0.0
    %2693 = vmatpush2.msra.mxu0 %v2190
    %2694 = vmatprep.subr.mxu0 0.0
    %2695 = vmatpush2.msra.mxu0 %v2189
    %2696 = vmatprep.subr.mxu0 0.0
    %2697 = vmatpush2.msra.mxu0 %v2188
    %2698 = vmatprep.subr.mxu0 0.0
    %2699 = vmatpush2.msra.mxu0 %v2187
    %2700 = vmatprep.subr.mxu0 0.0
    %2701 = vmatpush2.msra.mxu0 %v2186
    %2702 = vmatprep.subr.mxu0 0.0
    %2703 = vmatpush2.msra.mxu0 %v2185
    %2704 = vmatprep.subr.mxu0 0.0
    %2705 = vmatpush2.msra.mxu0 %v2184
    %2706 = vmatprep.subr.mxu0 0.0
    %2707 = vmatpush2.msra.mxu0 %v2183
    %2708 = vmatprep.subr.mxu0 0.0
    %2709 = vmatpush2.msra.mxu0 %v2182
    %2710 = vmatprep.mubr.f32.mxu0 %v2343
    %2711 = vmatmul.mubr.f32.gmra.mxu0 %v2342
    %v2712 = vpop.f32.mrf.mxu0
    %v2713 = vadd.f32 %v2643, %v2712
    %v2714 = vpop.f32.mrf.mxu0
    %2715 = vdwg.mxu0
    %2716 = vmatprep.subr.mxu0 0.0
    %2717 = vmatpush1.msra.mxu0 %v2213
    %2718 = vmatprep.subr.mxu0 0.0
    %2719 = vmatpush1.msra.mxu0 %v2212
    %2720 = vmatprep.subr.mxu0 0.0
    %2721 = vmatpush1.msra.mxu0 %v2211
    %2722 = vmatprep.subr.mxu0 0.0
    %2723 = vmatpush1.msra.mxu0 %v2210
    %2724 = vmatprep.subr.mxu0 0.0
    %2725 = vmatpush1.msra.mxu0 %v2209
    %2726 = vmatprep.subr.mxu0 0.0
    %2727 = vmatpush1.msra.mxu0 %v2208
    %2728 = vmatprep.subr.mxu0 0.0
    %2729 = vmatpush1.msra.mxu0 %v2207
    %2730 = vmatprep.subr.mxu0 0.0
    %2731 = vmatpush1.msra.mxu0 %v2206
    %2732 = vmatprep.subr.mxu0 0.0
    %2733 = vmatpush1.msra.mxu0 %v2205
    %2734 = vmatprep.subr.mxu0 0.0
    %2735 = vmatpush1.msra.mxu0 %v2204
    %2736 = vmatprep.subr.mxu0 0.0
    %2737 = vmatpush1.msra.mxu0 %v2203
    %2738 = vmatprep.subr.mxu0 0.0
    %2739 = vmatpush1.msra.mxu0 %v2202
    %2740 = vmatprep.subr.mxu0 0.0
    %2741 = vmatpush1.msra.mxu0 %v2201
    %2742 = vmatprep.subr.mxu0 0.0
    %2743 = vmatpush1.msra.mxu0 %v2200
    %2744 = vmatprep.subr.mxu0 0.0
    %2745 = vmatpush1.msra.mxu0 %v2199
    %2746 = vmatprep.subr.mxu0 0.0
    %2747 = vmatpush1.msra.mxu0 %v2198
    %2748 = vmatprep.subr.mxu0 0.0
    %2749 = vmatpush2.msra.mxu0 %v2229
    %2750 = vmatprep.subr.mxu0 0.0
    %2751 = vmatpush2.msra.mxu0 %v2228
    %2752 = vmatprep.subr.mxu0 0.0
    %2753 = vmatpush2.msra.mxu0 %v2227
    %2754 = vmatprep.subr.mxu0 0.0
    %2755 = vmatpush2.msra.mxu0 %v2226
    %2756 = vmatprep.subr.mxu0 0.0
    %2757 = vmatpush2.msra.mxu0 %v2225
    %2758 = vmatprep.subr.mxu0 0.0
    %2759 = vmatpush2.msra.mxu0 %v2224
    %2760 = vmatprep.subr.mxu0 0.0
    %2761 = vmatpush2.msra.mxu0 %v2223
    %2762 = vmatprep.subr.mxu0 0.0
    %2763 = vmatpush2.msra.mxu0 %v2222
    %2764 = vmatprep.subr.mxu0 0.0
    %2765 = vmatpush2.msra.mxu0 %v2221
    %2766 = vmatprep.subr.mxu0 0.0
    %2767 = vmatpush2.msra.mxu0 %v2220
    %2768 = vmatprep.subr.mxu0 0.0
    %2769 = vmatpush2.msra.mxu0 %v2219
    %2770 = vmatprep.subr.mxu0 0.0
    %2771 = vmatpush2.msra.mxu0 %v2218
    %2772 = vmatprep.subr.mxu0 0.0
    %2773 = vmatpush2.msra.mxu0 %v2217
    %2774 = vmatprep.subr.mxu0 0.0
    %2775 = vmatpush2.msra.mxu0 %v2216
    %2776 = vmatprep.subr.mxu0 0.0
    %2777 = vmatpush2.msra.mxu0 %v2215
    %2778 = vmatprep.subr.mxu0 0.0
    %2779 = vmatpush2.msra.mxu0 %v2214
    %2780 = vmatprep.mubr.f32.mxu0 %v2345
    %2781 = vmatmul.mubr.f32.gmra.mxu0 %v2344
    %v2782 = vpop.f32.mrf.mxu0
    %v2783 = vadd.f32 %v2713, %v2782
    %v2784 = vpop.f32.mrf.mxu0
    %2785 = vdwg.mxu0
    %2786 = vmatprep.subr.mxu0 0.0
    %2787 = vmatpush1.msra.mxu0 %v2245
    %2788 = vmatprep.subr.mxu0 0.0
    %2789 = vmatpush1.msra.mxu0 %v2244
    %2790 = vmatprep.subr.mxu0 0.0
    %2791 = vmatpush1.msra.mxu0 %v2243
    %2792 = vmatprep.subr.mxu0 0.0
    %2793 = vmatpush1.msra.mxu0 %v2242
    %2794 = vmatprep.subr.mxu0 0.0
    %2795 = vmatpush1.msra.mxu0 %v2241
    %2796 = vmatprep.subr.mxu0 0.0
    %2797 = vmatpush1.msra.mxu0 %v2240
    %2798 = vmatprep.subr.mxu0 0.0
    %2799 = vmatpush1.msra.mxu0 %v2239
    %2800 = vmatprep.subr.mxu0 0.0
    %2801 = vmatpush1.msra.mxu0 %v2238
    %2802 = vmatprep.subr.mxu0 0.0
    %2803 = vmatpush1.msra.mxu0 %v2237
    %2804 = vmatprep.subr.mxu0 0.0
    %2805 = vmatpush1.msra.mxu0 %v2236
    %2806 = vmatprep.subr.mxu0 0.0
    %2807 = vmatpush1.msra.mxu0 %v2235
    %2808 = vmatprep.subr.mxu0 0.0
    %2809 = vmatpush1.msra.mxu0 %v2234
    %2810 = vmatprep.subr.mxu0 0.0
    %2811 = vmatpush1.msra.mxu0 %v2233
    %2812 = vmatprep.subr.mxu0 0.0
    %2813 = vmatpush1.msra.mxu0 %v2232
    %2814 = vmatprep.subr.mxu0 0.0
    %2815 = vmatpush1.msra.mxu0 %v2231
    %2816 = vmatprep.subr.mxu0 0.0
    %2817 = vmatpush1.msra.mxu0 %v2230
    %2818 = vmatprep.subr.mxu0 0.0
    %2819 = vmatpush2.msra.mxu0 %v2261
    %2820 = vmatprep.subr.mxu0 0.0
    %2821 = vmatpush2.msra.mxu0 %v2260
    %2822 = vmatprep.subr.mxu0 0.0
    %2823 = vmatpush2.msra.mxu0 %v2259
    %2824 = vmatprep.subr.mxu0 0.0
    %2825 = vmatpush2.msra.mxu0 %v2258
    %2826 = vmatprep.subr.mxu0 0.0
    %2827 = vmatpush2.msra.mxu0 %v2257
    %2828 = vmatprep.subr.mxu0 0.0
    %2829 = vmatpush2.msra.mxu0 %v2256
    %2830 = vmatprep.subr.mxu0 0.0
    %2831 = vmatpush2.msra.mxu0 %v2255
    %2832 = vmatprep.subr.mxu0 0.0
    %2833 = vmatpush2.msra.mxu0 %v2254
    %2834 = vmatprep.subr.mxu0 0.0
    %2835 = vmatpush2.msra.mxu0 %v2253
    %2836 = vmatprep.subr.mxu0 0.0
    %2837 = vmatpush2.msra.mxu0 %v2252
    %2838 = vmatprep.subr.mxu0 0.0
    %2839 = vmatpush2.msra.mxu0 %v2251
    %2840 = vmatprep.subr.mxu0 0.0
    %2841 = vmatpush2.msra.mxu0 %v2250
    %2842 = vmatprep.subr.mxu0 0.0
    %2843 = vmatpush2.msra.mxu0 %v2249
    %2844 = vmatprep.subr.mxu0 0.0
    %2845 = vmatpush2.msra.mxu0 %v2248
    %2846 = vmatprep.subr.mxu0 0.0
    %2847 = vmatpush2.msra.mxu0 %v2247
    %2848 = vmatprep.subr.mxu0 0.0
    %2849 = vmatpush2.msra.mxu0 %v2246
    %2850 = vmatprep.mubr.f32.mxu0 %v2347
    %2851 = vmatmul.mubr.f32.gmra.mxu0 %v2346
    %v2852 = vpop.f32.mrf.mxu0
    %v2853 = vadd.f32 %v2783, %v2852
    %v2854 = vpop.f32.mrf.mxu0
    %2855 = vdwg.mxu0
    %2856 = vmatprep.subr.mxu0 0.0
    %2857 = vmatpush1.msra.mxu0 %v2277
    %2858 = vmatprep.subr.mxu0 0.0
    %2859 = vmatpush1.msra.mxu0 %v2276
    %2860 = vmatprep.subr.mxu0 0.0
    %2861 = vmatpush1.msra.mxu0 %v2275
    %2862 = vmatprep.subr.mxu0 0.0
    %2863 = vmatpush1.msra.mxu0 %v2274
    %2864 = vmatprep.subr.mxu0 0.0
    %2865 = vmatpush1.msra.mxu0 %v2273
    %2866 = vmatprep.subr.mxu0 0.0
    %2867 = vmatpush1.msra.mxu0 %v2272
    %2868 = vmatprep.subr.mxu0 0.0
    %2869 = vmatpush1.msra.mxu0 %v2271
    %2870 = vmatprep.subr.mxu0 0.0
    %2871 = vmatpush1.msra.mxu0 %v2270
    %2872 = vmatprep.subr.mxu0 0.0
    %2873 = vmatpush1.msra.mxu0 %v2269
    %2874 = vmatprep.subr.mxu0 0.0
    %2875 = vmatpush1.msra.mxu0 %v2268
    %2876 = vmatprep.subr.mxu0 0.0
    %2877 = vmatpush1.msra.mxu0 %v2267
    %2878 = vmatprep.subr.mxu0 0.0
    %2879 = vmatpush1.msra.mxu0 %v2266
    %2880 = vmatprep.subr.mxu0 0.0
    %2881 = vmatpush1.msra.mxu0 %v2265
    %2882 = vmatprep.subr.mxu0 0.0
    %2883 = vmatpush1.msra.mxu0 %v2264
    %2884 = vmatprep.subr.mxu0 0.0
    %2885 = vmatpush1.msra.mxu0 %v2263
    %2886 = vmatprep.subr.mxu0 0.0
    %2887 = vmatpush1.msra.mxu0 %v2262
    %2888 = vmatprep.subr.mxu0 0.0
    %2889 = vmatpush2.msra.mxu0 %v2293
    %2890 = vmatprep.subr.mxu0 0.0
    %2891 = vmatpush2.msra.mxu0 %v2292
    %2892 = vmatprep.subr.mxu0 0.0
    %2893 = vmatpush2.msra.mxu0 %v2291
    %2894 = vmatprep.subr.mxu0 0.0
    %2895 = vmatpush2.msra.mxu0 %v2290
    %2896 = vmatprep.subr.mxu0 0.0
    %2897 = vmatpush2.msra.mxu0 %v2289
    %2898 = vmatprep.subr.mxu0 0.0
    %2899 = vmatpush2.msra.mxu0 %v2288
    %2900 = vmatprep.subr.mxu0 0.0
    %2901 = vmatpush2.msra.mxu0 %v2287
    %2902 = vmatprep.subr.mxu0 0.0
    %2903 = vmatpush2.msra.mxu0 %v2286
    %2904 = vmatprep.subr.mxu0 0.0
    %2905 = vmatpush2.msra.mxu0 %v2285
    %2906 = vmatprep.subr.mxu0 0.0
    %2907 = vmatpush2.msra.mxu0 %v2284
    %2908 = vmatprep.subr.mxu0 0.0
    %2909 = vmatpush2.msra.mxu0 %v2283
    %2910 = vmatprep.subr.mxu0 0.0
    %2911 = vmatpush2.msra.mxu0 %v2282
    %2912 = vmatprep.subr.mxu0 0.0
    %2913 = vmatpush2.msra.mxu0 %v2281
    %2914 = vmatprep.subr.mxu0 0.0
    %2915 = vmatpush2.msra.mxu0 %v2280
    %2916 = vmatprep.subr.mxu0 0.0
    %2917 = vmatpush2.msra.mxu0 %v2279
    %2918 = vmatprep.subr.mxu0 0.0
    %2919 = vmatpush2.msra.mxu0 %v2278
    %2920 = vmatprep.mubr.f32.mxu0 %v2349
    %2921 = vmatmul.mubr.f32.gmra.mxu0 %v2348
    %v2922 = vpop.f32.mrf.mxu0
    %v2923 = vadd.f32 %v2853, %v2922
    %v2924 = vpop.f32.mrf.mxu0
    %2925 = vdwg.mxu0
    %2926 = vst [vmem:[#allocation2] sm:$0x3] %v2923
    // Predicated region
    $region14: #{deepmar_forward.1} parent=1 // pred_check
      _
    $region15: #{deepmar_forward.1} parent=1 // pred_check_branch
      %2928 = sbr.rel (0) target = $region17
    $region16: #{deepmar_forward.1} parent=1 // pred_region
      %s2930 = ssub.s32 32, 32
      %2931 = vsyncadd [#allocation3], %s2930
      %s2933 = sshll.u32 [#allocation2], 4
      %s2934 = int_to_ptr.vmem [resolvable:$true] %s2933
      %2936 = dma.vmem_to_hbm [thread:$0]  %s2934, 32, %s3, [#allocation3]
    $region17: #{deepmar_forward.1} parent=1 // pred_fallthru
      _
    // Predicated region
    $region18: #{deepmar_forward.1} parent=1 // pred_check
      _
    $region19: #{deepmar_forward.1} parent=1 // pred_check_branch
      %2938 = sbr.rel (0) target = $region21
    $region20: #{deepmar_forward.1} parent=1 // pred_region
      %2939 = dma.done [#allocation3], 32
    $region21: #{deepmar_forward.1} parent=1 // pred_fallthru
      _
    %2940 = vsyncpa [#allocation3], 1

</llo_original>
